<compile_context>
chip_gen: v6e
topology: v6e:2x2x1
jax: 0.10.0
libtpu: 0.0.40
codegen_flags: <defaults>
</compile_context>

<pallas_src>
import jax
import jax.numpy as jnp
from jax import lax
from jax.experimental import pallas as pl
from jax.experimental.pallas import tpu as pltpu


# ----------------------------------------------------------------------------
# Shared math helpers (used inside the kernel and by the pure-JAX reference).
# ----------------------------------------------------------------------------
def _round_up(n, m):
    return ((n + m - 1) // m) * m


def _layernorm(h, gamma, beta, eps=1e-5):
    m = jnp.mean(h, axis=-1, keepdims=True)
    c = h - m
    v = jnp.mean(c * c, axis=-1, keepdims=True)
    return c * lax.rsqrt(v + eps) * gamma + beta


# ----------------------------------------------------------------------------
# Fused multi-head MLP kernel (all heads unrolled inside one body).
# ----------------------------------------------------------------------------
def _fused_mlp_heads_kernel(x_ref, norm_ref, w1_ref, v1_ref, whf_ref, vhf_ref,
                            wo_ref, bo_ref, o_ref):
    # x_ref   : (TB, Dp)        f32  observation batch tile (shared by heads)
    # norm_ref: (M, 2, Dp)      f32  rows: [mean, 1/std] per head (padded)
    # w1_ref  : (M, Dp, H)      bf16 fc1 weights (pad rows are zero)
    # v1_ref  : (M, 3, H)       f32  rows: [b1, ln_gamma, ln_beta]
    # whf_ref : (M*L, H, H)     bf16 hidden-layer weights (head-major)
    # vhf_ref : (M*L, 3, H)     f32  rows: [bh, ln_gamma, ln_beta]
    # wo_ref  : (M, H, Npad)    bf16 fc_out weights, head m's true columns
    #                                placed at its packed offset, zero elsewhere
    # bo_ref  : (1, Npad)       f32  packed fc_out bias (all heads)
    # o_ref   : (TB, Npad)      f32  packed lane-dense output
    num_heads = w1_ref.shape[0]
    layer_n = whf_ref.shape[0] // num_heads

    x = x_ref[...]                                       # (TB, Dp) f32
    acc = jnp.zeros(o_ref.shape, jnp.float32)

    for m in range(num_heads):                           # static unroll, M = 3
        nrm = norm_ref[m]                                # (2, Dp)
        xm = jnp.clip((x - nrm[0:1, :]) * nrm[1:2, :], -10.0, 10.0)

        # fc1: Linear -> ReLU -> LayerNorm   (bf16 MXU operands, f32 acc)
        v1 = v1_ref[m]                                   # (3, H)
        h = jnp.dot(xm.astype(jnp.bfloat16), w1_ref[m],
                    preferred_element_type=jnp.float32) + v1[0:1, :]
        h = _layernorm(jnp.maximum(h, 0.0), v1[1:2, :], v1[2:3, :])

        # hidden layers (static unroll; layer count is small and static)
        for i in range(layer_n):
            idx = m * layer_n + i
            vh = vhf_ref[idx]                            # (3, H)
            hi = jnp.dot(h.astype(jnp.bfloat16), whf_ref[idx],
                         preferred_element_type=jnp.float32) + vh[0:1, :]
            h = _layernorm(jnp.maximum(hi, 0.0), vh[1:2, :], vh[2:3, :])

        # fc_out: accumulate this head's columns into the packed output.
        acc = acc + jnp.dot(h.astype(jnp.bfloat16), wo_ref[m],
                            preferred_element_type=jnp.float32)

    o_ref[...] = acc + bo_ref[...]


def fused_mlp_heads_forward(ob_pad, norm_stack, params, *, batch_tile):
    """Run all stacked MLP heads on one (padded) batch in a single pallas_call.

    ob_pad:     (B_pad, Dp) f32, B_pad % batch_tile == 0, Dp % 128 == 0
    norm_stack: (M, 2, Dp)  f32  per-head [mean, 1/std]
    params:     packed parameter dict (see init_stacked_mlp_params)
    returns:    (B_pad, Npad) f32 packed output
    """
    Bp, Dp = ob_pad.shape
    M, Dp2, H = params["w1"].shape
    assert Dp == Dp2
    L = params["wh"].shape[1]
    n_out = params["wo"].shape[-1]

    tb = batch_tile
    assert Bp % tb == 0 and tb % 8 == 0, "batch tile must be 8-aligned"

    whf = params["wh"].reshape(M * L, H, H)      # head-major flatten (free)
    vhf = params["vh"].reshape(M * L, 3, H)

    grid = (Bp // tb,)
    # Weight index_maps are independent of the batch grid axis -> fetched once
    # and reused across batch tiles (no per-step weight re-DMA).
    in_specs = [
        pl.BlockSpec((tb, Dp), lambda b: (b, 0)),            # ob tile
        pl.BlockSpec((M, 2, Dp), lambda b: (0, 0, 0)),        # norm stats
        pl.BlockSpec((M, Dp, H), lambda b: (0, 0, 0)),        # fc1 W
        pl.BlockSpec((M, 3, H), lambda b: (0, 0, 0)),         # fc1 b/gamma/beta
        pl.BlockSpec((M * L, H, H), lambda b: (0, 0, 0)),     # fc_h W
        pl.BlockSpec((M * L, 3, H), lambda b: (0, 0, 0)),     # fc_h b/gamma/beta
        pl.BlockSpec((M, H, n_out), lambda b: (0, 0, 0)),     # fc_out W (packed)
        pl.BlockSpec((1, n_out), lambda b: (0, 0)),           # fc_out b (packed)
    ]
    out_specs = pl.BlockSpec((tb, n_out), lambda b: (b, 0))

    return pl.pallas_call(
        _fused_mlp_heads_kernel,
        out_shape=jax.ShapeDtypeStruct((Bp, n_out), jnp.float32),
        grid_spec=pl.GridSpec(grid=grid, in_specs=in_specs, out_specs=out_specs),
        compiler_params=pltpu.CompilerParams(
            # Single batch axis, fully independent -> parallel (even split
            # across both TensorCores on v7x; near-no-op on v5e/v6e).
            dimension_semantics=("parallel",),
        ),
    )(ob_pad, norm_stack, params["w1"], params["v1"], whf, vhf,
      params["wo"], params["bo"])


# ----------------------------------------------------------------------------
# Pure-JAX reference (same math, same bf16 matmul casts) for correctness check.
# ----------------------------------------------------------------------------
def mlp_heads_reference(ob_pad, norm_stack, p):
    M, Dp, H = p["w1"].shape
    L = p["wh"].shape[1]
    out = jnp.broadcast_to(p["bo"], (ob_pad.shape[0], p["bo"].shape[-1]))
    out = out.astype(jnp.float32)
    for m in range(M):
        x = jnp.clip((ob_pad - norm_stack[m, 0]) * norm_stack[m, 1], -10.0, 10.0)
        v1 = p["v1"][m]
        h = jnp.dot(x.astype(jnp.bfloat16), p["w1"][m],
                    preferred_element_type=jnp.float32) + v1[0]
        h = _layernorm(jnp.maximum(h, 0.0), v1[1], v1[2])
        for i in range(L):
            vh = p["vh"][m, i]
            hi = jnp.dot(h.astype(jnp.bfloat16), p["wh"][m, i],
                         preferred_element_type=jnp.float32) + vh[0]
            h = _layernorm(jnp.maximum(hi, 0.0), vh[1], vh[2])
        out = out + jnp.dot(h.astype(jnp.bfloat16), p["wo"][m],
                            preferred_element_type=jnp.float32)
    return out


# ----------------------------------------------------------------------------
# Parameter construction (synthetic init; shapes match the PyTorch module).
# ----------------------------------------------------------------------------
def init_stacked_mlp_params(key, num_heads, d_in, d_pad, hid, layer_n, out_dims):
    """Build the packed parameter layout used by the fused kernel.

    * Weights in bf16 (MXU operands); LN/bias vectors in f32.
    * fc1 padded along the input dim to d_pad (zero rows).
    * fc_out of all heads packed column-wise into one lane-dense (H, Npad)
      slab per head so the kernel can accumulate a single packed output.
    """
    assert layer_n >= 1
    M, H, L = num_heads, hid, layer_n
    n_out_pad = _round_up(max(sum(out_dims), 1), 128)

    kk = jax.random.split(key, 10)

    # TODO(synk): PyTorch uses orthogonal_ init with ReLU gain; plain scaled
    # normals are used here since this is a synthetic-parameter kernel.
    w1 = jax.random.normal(kk[0], (M, d_in, H), jnp.float32) / jnp.sqrt(jnp.float32(d_in))
    w1 = jnp.pad(w1, ((0, 0), (0, d_pad - d_in), (0, 0)))
    b1 = 0.1 * jax.random.normal(kk[1], (M, 1, H), jnp.float32)
    g1 = 1.0 + 0.1 * jax.random.normal(kk[2], (M, 1, H), jnp.float32)
    be1 = 0.1 * jax.random.normal(kk[3], (M, 1, H), jnp.float32)
    v1 = jnp.concatenate([b1, g1, be1], axis=1)                 # (M, 3, H)

    wh = jax.random.normal(kk[4], (M, L, H, H), jnp.float32) / jnp.sqrt(jnp.float32(H))
    bh = 0.1 * jax.random.normal(kk[5], (M, L, 1, H), jnp.float32)
    gh = 1.0 + 0.1 * jax.random.normal(kk[6], (M, L, 1, H), jnp.float32)
    beh = 0.1 * jax.random.normal(kk[7], (M, L, 1, H), jnp.float32)
    vh = jnp.concatenate([bh, gh, beh], axis=2)                 # (M, L, 3, H)

    wo = jnp.zeros((M, H, n_out_pad), jnp.float32)
    bo = jnp.zeros((1, n_out_pad), jnp.float32)
    wkeys = jax.random.split(kk[8], M)
    bkeys = jax.random.split(kk[9], M)
    offsets, off = [], 0
    for h_idx, d_out in enumerate(out_dims):
        w = jax.random.normal(wkeys[h_idx], (H, d_out), jnp.float32) / jnp.sqrt(jnp.float32(H))
        b = 0.1 * jax.random.normal(bkeys[h_idx], (d_out,), jnp.float32)
        wo = wo.at[h_idx, :, off:off + d_out].set(w)
        bo = bo.at[0, off:off + d_out].set(b)
        offsets.append(off)
        off += d_out

    return dict(w1=w1.astype(jnp.bfloat16), v1=v1,
                wh=wh.astype(jnp.bfloat16), vh=vh,
                wo=wo.astype(jnp.bfloat16), bo=bo), tuple(offsets), n_out_pad


# ----------------------------------------------------------------------------
# RunningMeanStd (stateful host-side bookkeeping, faithful to the PyTorch code)
# ----------------------------------------------------------------------------
class RunningMeanStd:
    def __init__(self, shape=()):
        self.mean = jnp.zeros(shape, jnp.float32)
        self.var = jnp.ones(shape, jnp.float32)
        self.count = jnp.float32(1e-4)

    def update(self, x):
        batch_mean = jnp.mean(x, axis=0)
        batch_var = jnp.var(x, axis=0, ddof=1)   # torch.var default: unbiased
        self.update_from_moments(batch_mean, batch_var, x.shape[0])

    def update_from_moments(self, batch_mean, batch_var, batch_count):
        delta = batch_mean - self.mean
        tot = self.count + batch_count
        new_mean = self.mean + delta * batch_count / tot
        m_a = self.var * self.count
        m_b = batch_var * batch_count
        m2 = m_a + m_b + jnp.square(delta) * self.count * batch_count / tot
        self.mean = new_mean
        self.var = m2 / tot
        self.count = tot

    @property
    def std(self):
        return jnp.sqrt(self.var)


# ----------------------------------------------------------------------------
# MLPBase port: heavy compute in the Pallas kernel, glue in plain JAX.
# ----------------------------------------------------------------------------
class MLPBasePallas:
    def __init__(self, key, hid_size, num_hid_layers, num_options,
                 q_space_dim, pi_space_dim, mu_space_dim, ac_space_dim,
                 gaussian_fixed_var=True):
        # forward() feeds the same observation to both the q nets and pi net.
        assert q_space_dim == pi_space_dim
        self.hid_size = hid_size
        self.num_hid_layers = num_hid_layers
        self.num_options = num_options
        self.ac_space_dim = ac_space_dim
        self.obs_dim = q_space_dim
        self.d_pad = _round_up(q_space_dim, 128)
        self.gaussian_fixed_var = gaussian_fixed_var

        # heads packed along axis 0: [q_net0, q_net1, pi_net]
        self.params, self.out_offsets, self.n_out_pad = init_stacked_mlp_params(
            key, num_heads=3, d_in=q_space_dim, d_pad=self.d_pad,
            hid=hid_size, layer_n=num_hid_layers, out_dims=(1, 1, ac_space_dim))

        self.ob_rms_q = RunningMeanStd((q_space_dim,))
        self.ob_rms_pi = RunningMeanStd((pi_space_dim,))
        # gaussian_fixed_var path re-creates logstd = zeros each forward -> std = 1
        self.logstd = jnp.zeros((1, ac_space_dim), jnp.float32)
        # TODO(synk): option_net0 / option_net1 (mu_space_dim) are defined in the
        # PyTorch module but never used inside forward(); omitted here.
        # TODO(synk): wrap the kernel call + surrounding stacking in jax.jit to
        # shrink host dispatch overhead for tiny rollout batches.

        # debug stash (filled by forward) for reference checking in __main__
        self._dbg_norm_stack = None
        self._dbg_ob_pad = None

    def _build_norm_stack(self, q_mean, q_inv, pi_mean, pi_inv):
        pad = self.d_pad - self.obs_dim

        def stats(mean, inv):
            m = jnp.pad(mean, (0, pad))
            iv = jnp.pad(inv, (0, pad), constant_values=1.0)
            return jnp.stack([m, iv], axis=0)                  # (2, d_pad)

        return jnp.stack([stats(q_mean, q_inv),
                          stats(q_mean, q_inv),
                          stats(pi_mean, pi_inv)], axis=0)     # (3, 2, d_pad)

    def forward(self, ob, option=None, stochastic=True, rng=None):
        ob = jnp.asarray(ob, jnp.float32)
        if ob.ndim == 1:
            ob = ob[None, :]
        B, D = ob.shape
        assert D == self.obs_dim

        if B == 1:
            # PyTorch path: single obs -> clamp only, no running-stat normalize.
            q_mean = pi_mean = jnp.zeros((D,), jnp.float32)
            q_inv = pi_inv = jnp.ones((D,), jnp.float32)
        else:
            self.ob_rms_q.update(ob)
            self.ob_rms_pi.update(ob)
            q_mean, pi_mean = self.ob_rms_q.mean, self.ob_rms_pi.mean
            # 1/std precomputed on host (exact); kernel multiplies.
            q_inv = 1.0 / self.ob_rms_q.std
            pi_inv = 1.0 / self.ob_rms_pi.std

        norm_stack = self._build_norm_stack(q_mean, q_inv, pi_mean, pi_inv)

        # Batch tile: up to 512 rows (fills the MXU on v6e/v7x, fewer grid
        # steps), 8-aligned; batch zero-padded to a multiple of the tile.
        tb = min(512, _round_up(B, 8))
        B_pad = _round_up(B, tb)
        ob_pad = jnp.pad(ob, ((0, B_pad - B), (0, self.d_pad - D)))

        packed = fused_mlp_heads_forward(ob_pad, norm_stack, self.params,
                                         batch_tile=tb)[:B]

        self._dbg_norm_stack = norm_stack
        self._dbg_ob_pad = ob_pad

        off = self.out_offsets
        q_val0 = packed[:, off[0]]
        q_val1 = packed[:, off[1]]
        mean_a = packed[:, off[2]:off[2] + self.ac_space_dim]

        if option is None or int(option) == 1:
            vpred = q_val1
        else:
            vpred = q_val0

        std = jnp.exp(self.logstd)                      # == 1.0
        if stochastic:
            if rng is None:
                rng = jax.random.PRNGKey(0)
            ac = mean_a + std * jax.random.normal(rng, mean_a.shape, jnp.float32)
        else:
            ac = mean_a                                 # Normal mode == mean

        entropy = jnp.mean(
            (0.5 + 0.5 * jnp.log(2.0 * jnp.pi) + jnp.log(std)) * jnp.ones_like(mean_a))
        ac = jnp.clip(ac, -2.0, 2.0)
        log_prob = (-0.5 * jnp.square((ac - mean_a) / std)
                    - jnp.log(std) - 0.5 * jnp.log(2.0 * jnp.pi))
        return ac, vpred, mean_a, log_prob, entropy


if __name__ == "__main__":
    key = jax.random.PRNGKey(0)
    k_param, k_obs, k_sample = jax.random.split(key, 3)

    batch = 8
    obs_dim = 24            # q_space_dim == pi_space_dim
    hid_size = 128          # lane-dense hidden width
    num_hid_layers = 2
    ac_dim = 6
    num_options = 2

    model = MLPBasePallas(k_param, hid_size, num_hid_layers, num_options,
                          q_space_dim=obs_dim, pi_space_dim=obs_dim,
                          mu_space_dim=16, ac_space_dim=ac_dim)

    ob = jax.random.normal(k_obs, (batch, obs_dim), jnp.float32)

    ac, vpred, mean_a, log_prob, entropy = model.forward(
        ob, option=1, stochastic=True, rng=k_sample)
    ac, vpred, mean_a, log_prob, entropy = jax.block_until_ready(
        (ac, vpred, mean_a, log_prob, entropy))

    # --- pure-JAX reference check for the Pallas-computed heads ---
    packed_ref = mlp_heads_reference(model._dbg_ob_pad, model._dbg_norm_stack,
                                     model.params)[:batch]
    off = model.out_offsets
    q0_ref = packed_ref[:, off[0]]
    q1_ref = packed_ref[:, off[1]]
    mean_ref = packed_ref[:, off[2]:off[2] + ac_dim]

    assert ac.shape == (batch, ac_dim)
    assert vpred.shape == (batch,)
    assert log_prob.shape == (batch, ac_dim)
    assert jnp.allclose(vpred, q1_ref, atol=1e-2, rtol=1e-2), "vpred mismatch vs reference"
    assert jnp.allclose(mean_a, mean_ref, atol=1e-2, rtol=1e-2), "pi mean mismatch vs reference"
    assert bool(jnp.all(ac <= 2.0)) and bool(jnp.all(ac >= -2.0)), "ac clamp failed"
    assert bool(jnp.isfinite(entropy)), "entropy not finite"

    # --- single-observation path (B == 1, clamp-only normalization) ---
    ac1, vpred1, mean1, lp1, ent1 = model.forward(ob[0], option=0, stochastic=False)
    ac1, vpred1, mean1 = jax.block_until_ready((ac1, vpred1, mean1))
    assert ac1.shape == (1, ac_dim) and vpred1.shape == (1,)
    assert bool(jnp.all(jnp.isfinite(mean1)))

    # --- option=0 must route to q_net0 ---
    _, vpred0, _, _, _ = model.forward(ob, option=0, stochastic=False)
    packed_ref2 = mlp_heads_reference(model._dbg_ob_pad, model._dbg_norm_stack,
                                      model.params)[:batch]
    assert jnp.allclose(vpred0, packed_ref2[:, off[0]], atol=1e-2, rtol=1e-2), \
        "q_net0 vpred mismatch vs reference"

    print("KERNEL_OK")
</pallas_src>

<mosaic_0001>
module attributes {stable_mosaic.version = 11 : i64} {
  func.func @_fused_mlp_heads_kernel(%arg0: i32, %arg1: memref<8x128xf32, #tpu.memory_space<vmem>>, %arg2: memref<3x2x128xf32, #tpu.memory_space<vmem>>, %arg3: memref<3x128x128xbf16, #tpu.memory_space<vmem>>, %arg4: memref<3x3x128xf32, #tpu.memory_space<vmem>>, %arg5: memref<6x128x128xbf16, #tpu.memory_space<vmem>>, %arg6: memref<6x3x128xf32, #tpu.memory_space<vmem>>, %arg7: memref<3x128x128xbf16, #tpu.memory_space<vmem>>, %arg8: memref<1x128xf32, #tpu.memory_space<vmem>>, %arg9: memref<8x128xf32, #tpu.memory_space<vmem>>) attributes {dimension_semantics = [#tpu.dimension_semantics<parallel>], iteration_bounds = array<i64: 1>, scalar_prefetch = 0 : i64, scratch_operands = 0 : i64, tpu.core_type = #tpu.core_type<tc>, window_params = [{transform_indices = @transform_0, window_bounds = array<i64: 8, 128>}, {pipeline_mode = #tpu.pipeline_mode<synchronous>, transform_indices = @transform_1, window_bounds = array<i64: 3, 2, 128>}, {pipeline_mode = #tpu.pipeline_mode<synchronous>, transform_indices = @transform_2, window_bounds = array<i64: 3, 128, 128>}, {pipeline_mode = #tpu.pipeline_mode<synchronous>, transform_indices = @transform_3, window_bounds = array<i64: 3, 3, 128>}, {pipeline_mode = #tpu.pipeline_mode<synchronous>, transform_indices = @transform_4, window_bounds = array<i64: 6, 128, 128>}, {pipeline_mode = #tpu.pipeline_mode<synchronous>, transform_indices = @transform_5, window_bounds = array<i64: 6, 3, 128>}, {pipeline_mode = #tpu.pipeline_mode<synchronous>, transform_indices = @transform_6, window_bounds = array<i64: 3, 128, 128>}, {pipeline_mode = #tpu.pipeline_mode<synchronous>, transform_indices = @transform_7, window_bounds = array<i64: 1, 128>}, {transform_indices = @transform_8, window_bounds = array<i64: 8, 128>}]} {
    %c0 = arith.constant 0 : index
    %c0_0 = arith.constant 0 : index
    %0 = vector.load %arg1[%c0, %c0_0] : memref<8x128xf32, #tpu.memory_space<vmem>>, vector<8x128xf32>
    %cst = arith.constant 0.000000e+00 : f32
    %1 = vector.broadcast %cst : f32 to vector<8x128xf32>
    %c0_1 = arith.constant 0 : index
    %c0_2 = arith.constant 0 : index
    %c0_3 = arith.constant 0 : index
    %2 = vector.load %arg2[%c0_1, %c0_2, %c0_3] : memref<3x2x128xf32, #tpu.memory_space<vmem>>, vector<1x2x128xf32>
    %3 = vector.shape_cast %2 : vector<1x2x128xf32> to vector<2x128xf32>
    %4 = vector.extract_strided_slice %3 {offsets = [0, 0], sizes = [1, 128], strides = [1, 1]} : vector<2x128xf32> to vector<1x128xf32>
    %5 = vector.broadcast %4 : vector<1x128xf32> to vector<8x128xf32>
    %6 = arith.subf %0, %5 : vector<8x128xf32>
    %7 = vector.extract_strided_slice %3 {offsets = [1, 0], sizes = [1, 128], strides = [1, 1]} : vector<2x128xf32> to vector<1x128xf32>
    %8 = vector.broadcast %7 : vector<1x128xf32> to vector<8x128xf32>
    %9 = arith.mulf %6, %8 : vector<8x128xf32>
    %cst_4 = arith.constant -1.000000e+01 : f32
    %cst_5 = arith.constant 1.000000e+01 : f32
    %10 = vector.broadcast %cst_4 : f32 to vector<8x128xf32>
    %11 = arith.maximumf %10, %9 : vector<8x128xf32>
    %12 = vector.broadcast %cst_5 : f32 to vector<8x128xf32>
    %13 = arith.minimumf %12, %11 : vector<8x128xf32>
    %c0_6 = arith.constant 0 : index
    %c0_7 = arith.constant 0 : index
    %c0_8 = arith.constant 0 : index
    %14 = vector.load %arg4[%c0_6, %c0_7, %c0_8] : memref<3x3x128xf32, #tpu.memory_space<vmem>>, vector<1x3x128xf32>
    %15 = vector.shape_cast %14 : vector<1x3x128xf32> to vector<3x128xf32>
    %16 = arith.truncf %13 : vector<8x128xf32> to vector<8x128xbf16>
    %c0_9 = arith.constant 0 : index
    %c0_10 = arith.constant 0 : index
    %c0_11 = arith.constant 0 : index
    %17 = vector.load %arg3[%c0_9, %c0_10, %c0_11] : memref<3x128x128xbf16, #tpu.memory_space<vmem>>, vector<1x128x128xbf16>
    %18 = vector.shape_cast %17 : vector<1x128x128xbf16> to vector<128x128xbf16>
    %cst_12 = arith.constant dense<0.000000e+00> : vector<8x128xf32>
    %19 = tpu.matmul %16, %18, %cst_12 {dimension_numbers = #tpu.dot_dimension_numbers<[1], [0], [0], [1], [0, 0, 1, 1], [], []>} : vector<8x128xbf16>, vector<128x128xbf16>, vector<8x128xf32> -> vector<8x128xf32>
    %20 = vector.extract_strided_slice %15 {offsets = [0, 0], sizes = [1, 128], strides = [1, 1]} : vector<3x128xf32> to vector<1x128xf32>
    %21 = vector.broadcast %20 : vector<1x128xf32> to vector<8x128xf32>
    %22 = arith.addf %19, %21 : vector<8x128xf32>
    %cst_13 = arith.constant 0.000000e+00 : f32
    %23 = vector.broadcast %cst_13 : f32 to vector<8x128xf32>
    %24 = arith.maximumf %22, %23 : vector<8x128xf32>
    %25 = vector.extract_strided_slice %15 {offsets = [1, 0], sizes = [1, 128], strides = [1, 1]} : vector<3x128xf32> to vector<1x128xf32>
    %26 = vector.extract_strided_slice %15 {offsets = [2, 0], sizes = [1, 128], strides = [1, 1]} : vector<3x128xf32> to vector<1x128xf32>
    %cst_14 = arith.constant dense<0.000000e+00> : vector<8xf32>
    %27 = vector.multi_reduction <add>, %24, %cst_14 [1] : vector<8x128xf32> to vector<8xf32>
    %28 = vector.shape_cast %27 : vector<8xf32> to vector<8x1xf32>
    %cst_15 = arith.constant 1.280000e+02 : f32
    %29 = vector.broadcast %cst_15 : f32 to vector<8x1xf32>
    %30 = arith.divf %28, %29 : vector<8x1xf32>
    %31 = vector.broadcast %30 : vector<8x1xf32> to vector<8x128xf32>
    %32 = arith.subf %24, %31 : vector<8x128xf32>
    %33 = arith.mulf %32, %32 : vector<8x128xf32>
    %cst_16 = arith.constant dense<0.000000e+00> : vector<8xf32>
    %34 = vector.multi_reduction <add>, %33, %cst_16 [1] : vector<8x128xf32> to vector<8xf32>
    %35 = vector.shape_cast %34 : vector<8xf32> to vector<8x1xf32>
    %cst_17 = arith.constant 1.280000e+02 : f32
    %36 = vector.broadcast %cst_17 : f32 to vector<8x1xf32>
    %37 = arith.divf %35, %36 : vector<8x1xf32>
    %cst_18 = arith.constant 9.99999974E-6 : f32
    %38 = vector.broadcast %cst_18 : f32 to vector<8x1xf32>
    %39 = arith.addf %37, %38 : vector<8x1xf32>
    %40 = math.rsqrt %39 : vector<8x1xf32>
    %41 = vector.broadcast %40 : vector<8x1xf32> to vector<8x128xf32>
    %42 = arith.mulf %32, %41 : vector<8x128xf32>
    %43 = vector.broadcast %25 : vector<1x128xf32> to vector<8x128xf32>
    %44 = arith.mulf %42, %43 : vector<8x128xf32>
    %45 = vector.broadcast %26 : vector<1x128xf32> to vector<8x128xf32>
    %46 = arith.addf %44, %45 : vector<8x128xf32>
    %c0_19 = arith.constant 0 : index
    %c0_20 = arith.constant 0 : index
    %c0_21 = arith.constant 0 : index
    %47 = vector.load %arg6[%c0_19, %c0_20, %c0_21] : memref<6x3x128xf32, #tpu.memory_space<vmem>>, vector<1x3x128xf32>
    %48 = vector.shape_cast %47 : vector<1x3x128xf32> to vector<3x128xf32>
    %49 = arith.truncf %46 : vector<8x128xf32> to vector<8x128xbf16>
    %c0_22 = arith.constant 0 : index
    %c0_23 = arith.constant 0 : index
    %c0_24 = arith.constant 0 : index
    %50 = vector.load %arg5[%c0_22, %c0_23, %c0_24] : memref<6x128x128xbf16, #tpu.memory_space<vmem>>, vector<1x128x128xbf16>
    %51 = vector.shape_cast %50 : vector<1x128x128xbf16> to vector<128x128xbf16>
    %cst_25 = arith.constant dense<0.000000e+00> : vector<8x128xf32>
    %52 = tpu.matmul %49, %51, %cst_25 {dimension_numbers = #tpu.dot_dimension_numbers<[1], [0], [0], [1], [0, 0, 1, 1], [], []>} : vector<8x128xbf16>, vector<128x128xbf16>, vector<8x128xf32> -> vector<8x128xf32>
    %53 = vector.extract_strided_slice %48 {offsets = [0, 0], sizes = [1, 128], strides = [1, 1]} : vector<3x128xf32> to vector<1x128xf32>
    %54 = vector.broadcast %53 : vector<1x128xf32> to vector<8x128xf32>
    %55 = arith.addf %52, %54 : vector<8x128xf32>
    %cst_26 = arith.constant 0.000000e+00 : f32
    %56 = vector.broadcast %cst_26 : f32 to vector<8x128xf32>
    %57 = arith.maximumf %55, %56 : vector<8x128xf32>
    %58 = vector.extract_strided_slice %48 {offsets = [1, 0], sizes = [1, 128], strides = [1, 1]} : vector<3x128xf32> to vector<1x128xf32>
    %59 = vector.extract_strided_slice %48 {offsets = [2, 0], sizes = [1, 128], strides = [1, 1]} : vector<3x128xf32> to vector<1x128xf32>
    %cst_27 = arith.constant dense<0.000000e+00> : vector<8xf32>
    %60 = vector.multi_reduction <add>, %57, %cst_27 [1] : vector<8x128xf32> to vector<8xf32>
    %61 = vector.shape_cast %60 : vector<8xf32> to vector<8x1xf32>
    %cst_28 = arith.constant 1.280000e+02 : f32
    %62 = vector.broadcast %cst_28 : f32 to vector<8x1xf32>
    %63 = arith.divf %61, %62 : vector<8x1xf32>
    %64 = vector.broadcast %63 : vector<8x1xf32> to vector<8x128xf32>
    %65 = arith.subf %57, %64 : vector<8x128xf32>
    %66 = arith.mulf %65, %65 : vector<8x128xf32>
    %cst_29 = arith.constant dense<0.000000e+00> : vector<8xf32>
    %67 = vector.multi_reduction <add>, %66, %cst_29 [1] : vector<8x128xf32> to vector<8xf32>
    %68 = vector.shape_cast %67 : vector<8xf32> to vector<8x1xf32>
    %cst_30 = arith.constant 1.280000e+02 : f32
    %69 = vector.broadcast %cst_30 : f32 to vector<8x1xf32>
    %70 = arith.divf %68, %69 : vector<8x1xf32>
    %cst_31 = arith.constant 9.99999974E-6 : f32
    %71 = vector.broadcast %cst_31 : f32 to vector<8x1xf32>
    %72 = arith.addf %70, %71 : vector<8x1xf32>
    %73 = math.rsqrt %72 : vector<8x1xf32>
    %74 = vector.broadcast %73 : vector<8x1xf32> to vector<8x128xf32>
    %75 = arith.mulf %65, %74 : vector<8x128xf32>
    %76 = vector.broadcast %58 : vector<1x128xf32> to vector<8x128xf32>
    %77 = arith.mulf %75, %76 : vector<8x128xf32>
    %78 = vector.broadcast %59 : vector<1x128xf32> to vector<8x128xf32>
    %79 = arith.addf %77, %78 : vector<8x128xf32>
    %c1 = arith.constant 1 : index
    %c0_32 = arith.constant 0 : index
    %c0_33 = arith.constant 0 : index
    %80 = vector.load %arg6[%c1, %c0_32, %c0_33] : memref<6x3x128xf32, #tpu.memory_space<vmem>>, vector<1x3x128xf32>
    %81 = vector.shape_cast %80 : vector<1x3x128xf32> to vector<3x128xf32>
    %82 = arith.truncf %79 : vector<8x128xf32> to vector<8x128xbf16>
    %c1_34 = arith.constant 1 : index
    %c0_35 = arith.constant 0 : index
    %c0_36 = arith.constant 0 : index
    %83 = vector.load %arg5[%c1_34, %c0_35, %c0_36] : memref<6x128x128xbf16, #tpu.memory_space<vmem>>, vector<1x128x128xbf16>
    %84 = vector.shape_cast %83 : vector<1x128x128xbf16> to vector<128x128xbf16>
    %cst_37 = arith.constant dense<0.000000e+00> : vector<8x128xf32>
    %85 = tpu.matmul %82, %84, %cst_37 {dimension_numbers = #tpu.dot_dimension_numbers<[1], [0], [0], [1], [0, 0, 1, 1], [], []>} : vector<8x128xbf16>, vector<128x128xbf16>, vector<8x128xf32> -> vector<8x128xf32>
    %86 = vector.extract_strided_slice %81 {offsets = [0, 0], sizes = [1, 128], strides = [1, 1]} : vector<3x128xf32> to vector<1x128xf32>
    %87 = vector.broadcast %86 : vector<1x128xf32> to vector<8x128xf32>
    %88 = arith.addf %85, %87 : vector<8x128xf32>
    %cst_38 = arith.constant 0.000000e+00 : f32
    %89 = vector.broadcast %cst_38 : f32 to vector<8x128xf32>
    %90 = arith.maximumf %88, %89 : vector<8x128xf32>
    %91 = vector.extract_strided_slice %81 {offsets = [1, 0], sizes = [1, 128], strides = [1, 1]} : vector<3x128xf32> to vector<1x128xf32>
    %92 = vector.extract_strided_slice %81 {offsets = [2, 0], sizes = [1, 128], strides = [1, 1]} : vector<3x128xf32> to vector<1x128xf32>
    %cst_39 = arith.constant dense<0.000000e+00> : vector<8xf32>
    %93 = vector.multi_reduction <add>, %90, %cst_39 [1] : vector<8x128xf32> to vector<8xf32>
    %94 = vector.shape_cast %93 : vector<8xf32> to vector<8x1xf32>
    %cst_40 = arith.constant 1.280000e+02 : f32
    %95 = vector.broadcast %cst_40 : f32 to vector<8x1xf32>
    %96 = arith.divf %94, %95 : vector<8x1xf32>
    %97 = vector.broadcast %96 : vector<8x1xf32> to vector<8x128xf32>
    %98 = arith.subf %90, %97 : vector<8x128xf32>
    %99 = arith.mulf %98, %98 : vector<8x128xf32>
    %cst_41 = arith.constant dense<0.000000e+00> : vector<8xf32>
    %100 = vector.multi_reduction <add>, %99, %cst_41 [1] : vector<8x128xf32> to vector<8xf32>
    %101 = vector.shape_cast %100 : vector<8xf32> to vector<8x1xf32>
    %cst_42 = arith.constant 1.280000e+02 : f32
    %102 = vector.broadcast %cst_42 : f32 to vector<8x1xf32>
    %103 = arith.divf %101, %102 : vector<8x1xf32>
    %cst_43 = arith.constant 9.99999974E-6 : f32
    %104 = vector.broadcast %cst_43 : f32 to vector<8x1xf32>
    %105 = arith.addf %103, %104 : vector<8x1xf32>
    %106 = math.rsqrt %105 : vector<8x1xf32>
    %107 = vector.broadcast %106 : vector<8x1xf32> to vector<8x128xf32>
    %108 = arith.mulf %98, %107 : vector<8x128xf32>
    %109 = vector.broadcast %91 : vector<1x128xf32> to vector<8x128xf32>
    %110 = arith.mulf %108, %109 : vector<8x128xf32>
    %111 = vector.broadcast %92 : vector<1x128xf32> to vector<8x128xf32>
    %112 = arith.addf %110, %111 : vector<8x128xf32>
    %113 = arith.truncf %112 : vector<8x128xf32> to vector<8x128xbf16>
    %c0_44 = arith.constant 0 : index
    %c0_45 = arith.constant 0 : index
    %c0_46 = arith.constant 0 : index
    %114 = vector.load %arg7[%c0_44, %c0_45, %c0_46] : memref<3x128x128xbf16, #tpu.memory_space<vmem>>, vector<1x128x128xbf16>
    %115 = vector.shape_cast %114 : vector<1x128x128xbf16> to vector<128x128xbf16>
    %cst_47 = arith.constant dense<0.000000e+00> : vector<8x128xf32>
    %116 = tpu.matmul %113, %115, %cst_47 {dimension_numbers = #tpu.dot_dimension_numbers<[1], [0], [0], [1], [0, 0, 1, 1], [], []>} : vector<8x128xbf16>, vector<128x128xbf16>, vector<8x128xf32> -> vector<8x128xf32>
    %117 = arith.addf %1, %116 : vector<8x128xf32>
    %c1_48 = arith.constant 1 : index
    %c0_49 = arith.constant 0 : index
    %c0_50 = arith.constant 0 : index
    %118 = vector.load %arg2[%c1_48, %c0_49, %c0_50] : memref<3x2x128xf32, #tpu.memory_space<vmem>>, vector<1x2x128xf32>
    %119 = vector.shape_cast %118 : vector<1x2x128xf32> to vector<2x128xf32>
    %120 = vector.extract_strided_slice %119 {offsets = [0, 0], sizes = [1, 128], strides = [1, 1]} : vector<2x128xf32> to vector<1x128xf32>
    %121 = vector.broadcast %120 : vector<1x128xf32> to vector<8x128xf32>
    %122 = arith.subf %0, %121 : vector<8x128xf32>
    %123 = vector.extract_strided_slice %119 {offsets = [1, 0], sizes = [1, 128], strides = [1, 1]} : vector<2x128xf32> to vector<1x128xf32>
    %124 = vector.broadcast %123 : vector<1x128xf32> to vector<8x128xf32>
    %125 = arith.mulf %122, %124 : vector<8x128xf32>
    %cst_51 = arith.constant -1.000000e+01 : f32
    %cst_52 = arith.constant 1.000000e+01 : f32
    %126 = vector.broadcast %cst_51 : f32 to vector<8x128xf32>
    %127 = arith.maximumf %126, %125 : vector<8x128xf32>
    %128 = vector.broadcast %cst_52 : f32 to vector<8x128xf32>
    %129 = arith.minimumf %128, %127 : vector<8x128xf32>
    %c1_53 = arith.constant 1 : index
    %c0_54 = arith.constant 0 : index
    %c0_55 = arith.constant 0 : index
    %130 = vector.load %arg4[%c1_53, %c0_54, %c0_55] : memref<3x3x128xf32, #tpu.memory_space<vmem>>, vector<1x3x128xf32>
    %131 = vector.shape_cast %130 : vector<1x3x128xf32> to vector<3x128xf32>
    %132 = arith.truncf %129 : vector<8x128xf32> to vector<8x128xbf16>
    %c1_56 = arith.constant 1 : index
    %c0_57 = arith.constant 0 : index
    %c0_58 = arith.constant 0 : index
    %133 = vector.load %arg3[%c1_56, %c0_57, %c0_58] : memref<3x128x128xbf16, #tpu.memory_space<vmem>>, vector<1x128x128xbf16>
    %134 = vector.shape_cast %133 : vector<1x128x128xbf16> to vector<128x128xbf16>
    %cst_59 = arith.constant dense<0.000000e+00> : vector<8x128xf32>
    %135 = tpu.matmul %132, %134, %cst_59 {dimension_numbers = #tpu.dot_dimension_numbers<[1], [0], [0], [1], [0, 0, 1, 1], [], []>} : vector<8x128xbf16>, vector<128x128xbf16>, vector<8x128xf32> -> vector<8x128xf32>
    %136 = vector.extract_strided_slice %131 {offsets = [0, 0], sizes = [1, 128], strides = [1, 1]} : vector<3x128xf32> to vector<1x128xf32>
    %137 = vector.broadcast %136 : vector<1x128xf32> to vector<8x128xf32>
    %138 = arith.addf %135, %137 : vector<8x128xf32>
    %cst_60 = arith.constant 0.000000e+00 : f32
    %139 = vector.broadcast %cst_60 : f32 to vector<8x128xf32>
    %140 = arith.maximumf %138, %139 : vector<8x128xf32>
    %141 = vector.extract_strided_slice %131 {offsets = [1, 0], sizes = [1, 128], strides = [1, 1]} : vector<3x128xf32> to vector<1x128xf32>
    %142 = vector.extract_strided_slice %131 {offsets = [2, 0], sizes = [1, 128], strides = [1, 1]} : vector<3x128xf32> to vector<1x128xf32>
    %cst_61 = arith.constant dense<0.000000e+00> : vector<8xf32>
    %143 = vector.multi_reduction <add>, %140, %cst_61 [1] : vector<8x128xf32> to vector<8xf32>
    %144 = vector.shape_cast %143 : vector<8xf32> to vector<8x1xf32>
    %cst_62 = arith.constant 1.280000e+02 : f32
    %145 = vector.broadcast %cst_62 : f32 to vector<8x1xf32>
    %146 = arith.divf %144, %145 : vector<8x1xf32>
    %147 = vector.broadcast %146 : vector<8x1xf32> to vector<8x128xf32>
    %148 = arith.subf %140, %147 : vector<8x128xf32>
    %149 = arith.mulf %148, %148 : vector<8x128xf32>
    %cst_63 = arith.constant dense<0.000000e+00> : vector<8xf32>
    %150 = vector.multi_reduction <add>, %149, %cst_63 [1] : vector<8x128xf32> to vector<8xf32>
    %151 = vector.shape_cast %150 : vector<8xf32> to vector<8x1xf32>
    %cst_64 = arith.constant 1.280000e+02 : f32
    %152 = vector.broadcast %cst_64 : f32 to vector<8x1xf32>
    %153 = arith.divf %151, %152 : vector<8x1xf32>
    %cst_65 = arith.constant 9.99999974E-6 : f32
    %154 = vector.broadcast %cst_65 : f32 to vector<8x1xf32>
    %155 = arith.addf %153, %154 : vector<8x1xf32>
    %156 = math.rsqrt %155 : vector<8x1xf32>
    %157 = vector.broadcast %156 : vector<8x1xf32> to vector<8x128xf32>
    %158 = arith.mulf %148, %157 : vector<8x128xf32>
    %159 = vector.broadcast %141 : vector<1x128xf32> to vector<8x128xf32>
    %160 = arith.mulf %158, %159 : vector<8x128xf32>
    %161 = vector.broadcast %142 : vector<1x128xf32> to vector<8x128xf32>
    %162 = arith.addf %160, %161 : vector<8x128xf32>
    %c2 = arith.constant 2 : index
    %c0_66 = arith.constant 0 : index
    %c0_67 = arith.constant 0 : index
    %163 = vector.load %arg6[%c2, %c0_66, %c0_67] : memref<6x3x128xf32, #tpu.memory_space<vmem>>, vector<1x3x128xf32>
    %164 = vector.shape_cast %163 : vector<1x3x128xf32> to vector<3x128xf32>
    %165 = arith.truncf %162 : vector<8x128xf32> to vector<8x128xbf16>
    %c2_68 = arith.constant 2 : index
    %c0_69 = arith.constant 0 : index
    %c0_70 = arith.constant 0 : index
    %166 = vector.load %arg5[%c2_68, %c0_69, %c0_70] : memref<6x128x128xbf16, #tpu.memory_space<vmem>>, vector<1x128x128xbf16>
    %167 = vector.shape_cast %166 : vector<1x128x128xbf16> to vector<128x128xbf16>
    %cst_71 = arith.constant dense<0.000000e+00> : vector<8x128xf32>
    %168 = tpu.matmul %165, %167, %cst_71 {dimension_numbers = #tpu.dot_dimension_numbers<[1], [0], [0], [1], [0, 0, 1, 1], [], []>} : vector<8x128xbf16>, vector<128x128xbf16>, vector<8x128xf32> -> vector<8x128xf32>
    %169 = vector.extract_strided_slice %164 {offsets = [0, 0], sizes = [1, 128], strides = [1, 1]} : vector<3x128xf32> to vector<1x128xf32>
    %170 = vector.broadcast %169 : vector<1x128xf32> to vector<8x128xf32>
    %171 = arith.addf %168, %170 : vector<8x128xf32>
    %cst_72 = arith.constant 0.000000e+00 : f32
    %172 = vector.broadcast %cst_72 : f32 to vector<8x128xf32>
    %173 = arith.maximumf %171, %172 : vector<8x128xf32>
    %174 = vector.extract_strided_slice %164 {offsets = [1, 0], sizes = [1, 128], strides = [1, 1]} : vector<3x128xf32> to vector<1x128xf32>
    %175 = vector.extract_strided_slice %164 {offsets = [2, 0], sizes = [1, 128], strides = [1, 1]} : vector<3x128xf32> to vector<1x128xf32>
    %cst_73 = arith.constant dense<0.000000e+00> : vector<8xf32>
    %176 = vector.multi_reduction <add>, %173, %cst_73 [1] : vector<8x128xf32> to vector<8xf32>
    %177 = vector.shape_cast %176 : vector<8xf32> to vector<8x1xf32>
    %cst_74 = arith.constant 1.280000e+02 : f32
    %178 = vector.broadcast %cst_74 : f32 to vector<8x1xf32>
    %179 = arith.divf %177, %178 : vector<8x1xf32>
    %180 = vector.broadcast %179 : vector<8x1xf32> to vector<8x128xf32>
    %181 = arith.subf %173, %180 : vector<8x128xf32>
    %182 = arith.mulf %181, %181 : vector<8x128xf32>
    %cst_75 = arith.constant dense<0.000000e+00> : vector<8xf32>
    %183 = vector.multi_reduction <add>, %182, %cst_75 [1] : vector<8x128xf32> to vector<8xf32>
    %184 = vector.shape_cast %183 : vector<8xf32> to vector<8x1xf32>
    %cst_76 = arith.constant 1.280000e+02 : f32
    %185 = vector.broadcast %cst_76 : f32 to vector<8x1xf32>
    %186 = arith.divf %184, %185 : vector<8x1xf32>
    %cst_77 = arith.constant 9.99999974E-6 : f32
    %187 = vector.broadcast %cst_77 : f32 to vector<8x1xf32>
    %188 = arith.addf %186, %187 : vector<8x1xf32>
    %189 = math.rsqrt %188 : vector<8x1xf32>
    %190 = vector.broadcast %189 : vector<8x1xf32> to vector<8x128xf32>
    %191 = arith.mulf %181, %190 : vector<8x128xf32>
    %192 = vector.broadcast %174 : vector<1x128xf32> to vector<8x128xf32>
    %193 = arith.mulf %191, %192 : vector<8x128xf32>
    %194 = vector.broadcast %175 : vector<1x128xf32> to vector<8x128xf32>
    %195 = arith.addf %193, %194 : vector<8x128xf32>
    %c3 = arith.constant 3 : index
    %c0_78 = arith.constant 0 : index
    %c0_79 = arith.constant 0 : index
    %196 = vector.load %arg6[%c3, %c0_78, %c0_79] : memref<6x3x128xf32, #tpu.memory_space<vmem>>, vector<1x3x128xf32>
    %197 = vector.shape_cast %196 : vector<1x3x128xf32> to vector<3x128xf32>
    %198 = arith.truncf %195 : vector<8x128xf32> to vector<8x128xbf16>
    %c3_80 = arith.constant 3 : index
    %c0_81 = arith.constant 0 : index
    %c0_82 = arith.constant 0 : index
    %199 = vector.load %arg5[%c3_80, %c0_81, %c0_82] : memref<6x128x128xbf16, #tpu.memory_space<vmem>>, vector<1x128x128xbf16>
    %200 = vector.shape_cast %199 : vector<1x128x128xbf16> to vector<128x128xbf16>
    %cst_83 = arith.constant dense<0.000000e+00> : vector<8x128xf32>
    %201 = tpu.matmul %198, %200, %cst_83 {dimension_numbers = #tpu.dot_dimension_numbers<[1], [0], [0], [1], [0, 0, 1, 1], [], []>} : vector<8x128xbf16>, vector<128x128xbf16>, vector<8x128xf32> -> vector<8x128xf32>
    %202 = vector.extract_strided_slice %197 {offsets = [0, 0], sizes = [1, 128], strides = [1, 1]} : vector<3x128xf32> to vector<1x128xf32>
    %203 = vector.broadcast %202 : vector<1x128xf32> to vector<8x128xf32>
    %204 = arith.addf %201, %203 : vector<8x128xf32>
    %cst_84 = arith.constant 0.000000e+00 : f32
    %205 = vector.broadcast %cst_84 : f32 to vector<8x128xf32>
    %206 = arith.maximumf %204, %205 : vector<8x128xf32>
    %207 = vector.extract_strided_slice %197 {offsets = [1, 0], sizes = [1, 128], strides = [1, 1]} : vector<3x128xf32> to vector<1x128xf32>
    %208 = vector.extract_strided_slice %197 {offsets = [2, 0], sizes = [1, 128], strides = [1, 1]} : vector<3x128xf32> to vector<1x128xf32>
    %cst_85 = arith.constant dense<0.000000e+00> : vector<8xf32>
    %209 = vector.multi_reduction <add>, %206, %cst_85 [1] : vector<8x128xf32> to vector<8xf32>
    %210 = vector.shape_cast %209 : vector<8xf32> to vector<8x1xf32>
    %cst_86 = arith.constant 1.280000e+02 : f32
    %211 = vector.broadcast %cst_86 : f32 to vector<8x1xf32>
    %212 = arith.divf %210, %211 : vector<8x1xf32>
    %213 = vector.broadcast %212 : vector<8x1xf32> to vector<8x128xf32>
    %214 = arith.subf %206, %213 : vector<8x128xf32>
    %215 = arith.mulf %214, %214 : vector<8x128xf32>
    %cst_87 = arith.constant dense<0.000000e+00> : vector<8xf32>
    %216 = vector.multi_reduction <add>, %215, %cst_87 [1] : vector<8x128xf32> to vector<8xf32>
    %217 = vector.shape_cast %216 : vector<8xf32> to vector<8x1xf32>
    %cst_88 = arith.constant 1.280000e+02 : f32
    %218 = vector.broadcast %cst_88 : f32 to vector<8x1xf32>
    %219 = arith.divf %217, %218 : vector<8x1xf32>
    %cst_89 = arith.constant 9.99999974E-6 : f32
    %220 = vector.broadcast %cst_89 : f32 to vector<8x1xf32>
    %221 = arith.addf %219, %220 : vector<8x1xf32>
    %222 = math.rsqrt %221 : vector<8x1xf32>
    %223 = vector.broadcast %222 : vector<8x1xf32> to vector<8x128xf32>
    %224 = arith.mulf %214, %223 : vector<8x128xf32>
    %225 = vector.broadcast %207 : vector<1x128xf32> to vector<8x128xf32>
    %226 = arith.mulf %224, %225 : vector<8x128xf32>
    %227 = vector.broadcast %208 : vector<1x128xf32> to vector<8x128xf32>
    %228 = arith.addf %226, %227 : vector<8x128xf32>
    %229 = arith.truncf %228 : vector<8x128xf32> to vector<8x128xbf16>
    %c1_90 = arith.constant 1 : index
    %c0_91 = arith.constant 0 : index
    %c0_92 = arith.constant 0 : index
    %230 = vector.load %arg7[%c1_90, %c0_91, %c0_92] : memref<3x128x128xbf16, #tpu.memory_space<vmem>>, vector<1x128x128xbf16>
    %231 = vector.shape_cast %230 : vector<1x128x128xbf16> to vector<128x128xbf16>
    %cst_93 = arith.constant dense<0.000000e+00> : vector<8x128xf32>
    %232 = tpu.matmul %229, %231, %cst_93 {dimension_numbers = #tpu.dot_dimension_numbers<[1], [0], [0], [1], [0, 0, 1, 1], [], []>} : vector<8x128xbf16>, vector<128x128xbf16>, vector<8x128xf32> -> vector<8x128xf32>
    %233 = arith.addf %117, %232 : vector<8x128xf32>
    %c2_94 = arith.constant 2 : index
    %c0_95 = arith.constant 0 : index
    %c0_96 = arith.constant 0 : index
    %234 = vector.load %arg2[%c2_94, %c0_95, %c0_96] : memref<3x2x128xf32, #tpu.memory_space<vmem>>, vector<1x2x128xf32>
    %235 = vector.shape_cast %234 : vector<1x2x128xf32> to vector<2x128xf32>
    %236 = vector.extract_strided_slice %235 {offsets = [0, 0], sizes = [1, 128], strides = [1, 1]} : vector<2x128xf32> to vector<1x128xf32>
    %237 = vector.broadcast %236 : vector<1x128xf32> to vector<8x128xf32>
    %238 = arith.subf %0, %237 : vector<8x128xf32>
    %239 = vector.extract_strided_slice %235 {offsets = [1, 0], sizes = [1, 128], strides = [1, 1]} : vector<2x128xf32> to vector<1x128xf32>
    %240 = vector.broadcast %239 : vector<1x128xf32> to vector<8x128xf32>
    %241 = arith.mulf %238, %240 : vector<8x128xf32>
    %cst_97 = arith.constant -1.000000e+01 : f32
    %cst_98 = arith.constant 1.000000e+01 : f32
    %242 = vector.broadcast %cst_97 : f32 to vector<8x128xf32>
    %243 = arith.maximumf %242, %241 : vector<8x128xf32>
    %244 = vector.broadcast %cst_98 : f32 to vector<8x128xf32>
    %245 = arith.minimumf %244, %243 : vector<8x128xf32>
    %c2_99 = arith.constant 2 : index
    %c0_100 = arith.constant 0 : index
    %c0_101 = arith.constant 0 : index
    %246 = vector.load %arg4[%c2_99, %c0_100, %c0_101] : memref<3x3x128xf32, #tpu.memory_space<vmem>>, vector<1x3x128xf32>
    %247 = vector.shape_cast %246 : vector<1x3x128xf32> to vector<3x128xf32>
    %248 = arith.truncf %245 : vector<8x128xf32> to vector<8x128xbf16>
    %c2_102 = arith.constant 2 : index
    %c0_103 = arith.constant 0 : index
    %c0_104 = arith.constant 0 : index
    %249 = vector.load %arg3[%c2_102, %c0_103, %c0_104] : memref<3x128x128xbf16, #tpu.memory_space<vmem>>, vector<1x128x128xbf16>
    %250 = vector.shape_cast %249 : vector<1x128x128xbf16> to vector<128x128xbf16>
    %cst_105 = arith.constant dense<0.000000e+00> : vector<8x128xf32>
    %251 = tpu.matmul %248, %250, %cst_105 {dimension_numbers = #tpu.dot_dimension_numbers<[1], [0], [0], [1], [0, 0, 1, 1], [], []>} : vector<8x128xbf16>, vector<128x128xbf16>, vector<8x128xf32> -> vector<8x128xf32>
    %252 = vector.extract_strided_slice %247 {offsets = [0, 0], sizes = [1, 128], strides = [1, 1]} : vector<3x128xf32> to vector<1x128xf32>
    %253 = vector.broadcast %252 : vector<1x128xf32> to vector<8x128xf32>
    %254 = arith.addf %251, %253 : vector<8x128xf32>
    %cst_106 = arith.constant 0.000000e+00 : f32
    %255 = vector.broadcast %cst_106 : f32 to vector<8x128xf32>
    %256 = arith.maximumf %254, %255 : vector<8x128xf32>
    %257 = vector.extract_strided_slice %247 {offsets = [1, 0], sizes = [1, 128], strides = [1, 1]} : vector<3x128xf32> to vector<1x128xf32>
    %258 = vector.extract_strided_slice %247 {offsets = [2, 0], sizes = [1, 128], strides = [1, 1]} : vector<3x128xf32> to vector<1x128xf32>
    %cst_107 = arith.constant dense<0.000000e+00> : vector<8xf32>
    %259 = vector.multi_reduction <add>, %256, %cst_107 [1] : vector<8x128xf32> to vector<8xf32>
    %260 = vector.shape_cast %259 : vector<8xf32> to vector<8x1xf32>
    %cst_108 = arith.constant 1.280000e+02 : f32
    %261 = vector.broadcast %cst_108 : f32 to vector<8x1xf32>
    %262 = arith.divf %260, %261 : vector<8x1xf32>
    %263 = vector.broadcast %262 : vector<8x1xf32> to vector<8x128xf32>
    %264 = arith.subf %256, %263 : vector<8x128xf32>
    %265 = arith.mulf %264, %264 : vector<8x128xf32>
    %cst_109 = arith.constant dense<0.000000e+00> : vector<8xf32>
    %266 = vector.multi_reduction <add>, %265, %cst_109 [1] : vector<8x128xf32> to vector<8xf32>
    %267 = vector.shape_cast %266 : vector<8xf32> to vector<8x1xf32>
    %cst_110 = arith.constant 1.280000e+02 : f32
    %268 = vector.broadcast %cst_110 : f32 to vector<8x1xf32>
    %269 = arith.divf %267, %268 : vector<8x1xf32>
    %cst_111 = arith.constant 9.99999974E-6 : f32
    %270 = vector.broadcast %cst_111 : f32 to vector<8x1xf32>
    %271 = arith.addf %269, %270 : vector<8x1xf32>
    %272 = math.rsqrt %271 : vector<8x1xf32>
    %273 = vector.broadcast %272 : vector<8x1xf32> to vector<8x128xf32>
    %274 = arith.mulf %264, %273 : vector<8x128xf32>
    %275 = vector.broadcast %257 : vector<1x128xf32> to vector<8x128xf32>
    %276 = arith.mulf %274, %275 : vector<8x128xf32>
    %277 = vector.broadcast %258 : vector<1x128xf32> to vector<8x128xf32>
    %278 = arith.addf %276, %277 : vector<8x128xf32>
    %c4 = arith.constant 4 : index
    %c0_112 = arith.constant 0 : index
    %c0_113 = arith.constant 0 : index
    %279 = vector.load %arg6[%c4, %c0_112, %c0_113] : memref<6x3x128xf32, #tpu.memory_space<vmem>>, vector<1x3x128xf32>
    %280 = vector.shape_cast %279 : vector<1x3x128xf32> to vector<3x128xf32>
    %281 = arith.truncf %278 : vector<8x128xf32> to vector<8x128xbf16>
    %c4_114 = arith.constant 4 : index
    %c0_115 = arith.constant 0 : index
    %c0_116 = arith.constant 0 : index
    %282 = vector.load %arg5[%c4_114, %c0_115, %c0_116] : memref<6x128x128xbf16, #tpu.memory_space<vmem>>, vector<1x128x128xbf16>
    %283 = vector.shape_cast %282 : vector<1x128x128xbf16> to vector<128x128xbf16>
    %cst_117 = arith.constant dense<0.000000e+00> : vector<8x128xf32>
    %284 = tpu.matmul %281, %283, %cst_117 {dimension_numbers = #tpu.dot_dimension_numbers<[1], [0], [0], [1], [0, 0, 1, 1], [], []>} : vector<8x128xbf16>, vector<128x128xbf16>, vector<8x128xf32> -> vector<8x128xf32>
    %285 = vector.extract_strided_slice %280 {offsets = [0, 0], sizes = [1, 128], strides = [1, 1]} : vector<3x128xf32> to vector<1x128xf32>
    %286 = vector.broadcast %285 : vector<1x128xf32> to vector<8x128xf32>
    %287 = arith.addf %284, %286 : vector<8x128xf32>
    %cst_118 = arith.constant 0.000000e+00 : f32
    %288 = vector.broadcast %cst_118 : f32 to vector<8x128xf32>
    %289 = arith.maximumf %287, %288 : vector<8x128xf32>
    %290 = vector.extract_strided_slice %280 {offsets = [1, 0], sizes = [1, 128], strides = [1, 1]} : vector<3x128xf32> to vector<1x128xf32>
    %291 = vector.extract_strided_slice %280 {offsets = [2, 0], sizes = [1, 128], strides = [1, 1]} : vector<3x128xf32> to vector<1x128xf32>
    %cst_119 = arith.constant dense<0.000000e+00> : vector<8xf32>
    %292 = vector.multi_reduction <add>, %289, %cst_119 [1] : vector<8x128xf32> to vector<8xf32>
    %293 = vector.shape_cast %292 : vector<8xf32> to vector<8x1xf32>
    %cst_120 = arith.constant 1.280000e+02 : f32
    %294 = vector.broadcast %cst_120 : f32 to vector<8x1xf32>
    %295 = arith.divf %293, %294 : vector<8x1xf32>
    %296 = vector.broadcast %295 : vector<8x1xf32> to vector<8x128xf32>
    %297 = arith.subf %289, %296 : vector<8x128xf32>
    %298 = arith.mulf %297, %297 : vector<8x128xf32>
    %cst_121 = arith.constant dense<0.000000e+00> : vector<8xf32>
    %299 = vector.multi_reduction <add>, %298, %cst_121 [1] : vector<8x128xf32> to vector<8xf32>
    %300 = vector.shape_cast %299 : vector<8xf32> to vector<8x1xf32>
    %cst_122 = arith.constant 1.280000e+02 : f32
    %301 = vector.broadcast %cst_122 : f32 to vector<8x1xf32>
    %302 = arith.divf %300, %301 : vector<8x1xf32>
    %cst_123 = arith.constant 9.99999974E-6 : f32
    %303 = vector.broadcast %cst_123 : f32 to vector<8x1xf32>
    %304 = arith.addf %302, %303 : vector<8x1xf32>
    %305 = math.rsqrt %304 : vector<8x1xf32>
    %306 = vector.broadcast %305 : vector<8x1xf32> to vector<8x128xf32>
    %307 = arith.mulf %297, %306 : vector<8x128xf32>
    %308 = vector.broadcast %290 : vector<1x128xf32> to vector<8x128xf32>
    %309 = arith.mulf %307, %308 : vector<8x128xf32>
    %310 = vector.broadcast %291 : vector<1x128xf32> to vector<8x128xf32>
    %311 = arith.addf %309, %310 : vector<8x128xf32>
    %c5 = arith.constant 5 : index
    %c0_124 = arith.constant 0 : index
    %c0_125 = arith.constant 0 : index
    %312 = vector.load %arg6[%c5, %c0_124, %c0_125] : memref<6x3x128xf32, #tpu.memory_space<vmem>>, vector<1x3x128xf32>
    %313 = vector.shape_cast %312 : vector<1x3x128xf32> to vector<3x128xf32>
    %314 = arith.truncf %311 : vector<8x128xf32> to vector<8x128xbf16>
    %c5_126 = arith.constant 5 : index
    %c0_127 = arith.constant 0 : index
    %c0_128 = arith.constant 0 : index
    %315 = vector.load %arg5[%c5_126, %c0_127, %c0_128] : memref<6x128x128xbf16, #tpu.memory_space<vmem>>, vector<1x128x128xbf16>
    %316 = vector.shape_cast %315 : vector<1x128x128xbf16> to vector<128x128xbf16>
    %cst_129 = arith.constant dense<0.000000e+00> : vector<8x128xf32>
    %317 = tpu.matmul %314, %316, %cst_129 {dimension_numbers = #tpu.dot_dimension_numbers<[1], [0], [0], [1], [0, 0, 1, 1], [], []>} : vector<8x128xbf16>, vector<128x128xbf16>, vector<8x128xf32> -> vector<8x128xf32>
    %318 = vector.extract_strided_slice %313 {offsets = [0, 0], sizes = [1, 128], strides = [1, 1]} : vector<3x128xf32> to vector<1x128xf32>
    %319 = vector.broadcast %318 : vector<1x128xf32> to vector<8x128xf32>
    %320 = arith.addf %317, %319 : vector<8x128xf32>
    %cst_130 = arith.constant 0.000000e+00 : f32
    %321 = vector.broadcast %cst_130 : f32 to vector<8x128xf32>
    %322 = arith.maximumf %320, %321 : vector<8x128xf32>
    %323 = vector.extract_strided_slice %313 {offsets = [1, 0], sizes = [1, 128], strides = [1, 1]} : vector<3x128xf32> to vector<1x128xf32>
    %324 = vector.extract_strided_slice %313 {offsets = [2, 0], sizes = [1, 128], strides = [1, 1]} : vector<3x128xf32> to vector<1x128xf32>
    %cst_131 = arith.constant dense<0.000000e+00> : vector<8xf32>
    %325 = vector.multi_reduction <add>, %322, %cst_131 [1] : vector<8x128xf32> to vector<8xf32>
    %326 = vector.shape_cast %325 : vector<8xf32> to vector<8x1xf32>
    %cst_132 = arith.constant 1.280000e+02 : f32
    %327 = vector.broadcast %cst_132 : f32 to vector<8x1xf32>
    %328 = arith.divf %326, %327 : vector<8x1xf32>
    %329 = vector.broadcast %328 : vector<8x1xf32> to vector<8x128xf32>
    %330 = arith.subf %322, %329 : vector<8x128xf32>
    %331 = arith.mulf %330, %330 : vector<8x128xf32>
    %cst_133 = arith.constant dense<0.000000e+00> : vector<8xf32>
    %332 = vector.multi_reduction <add>, %331, %cst_133 [1] : vector<8x128xf32> to vector<8xf32>
    %333 = vector.shape_cast %332 : vector<8xf32> to vector<8x1xf32>
    %cst_134 = arith.constant 1.280000e+02 : f32
    %334 = vector.broadcast %cst_134 : f32 to vector<8x1xf32>
    %335 = arith.divf %333, %334 : vector<8x1xf32>
    %cst_135 = arith.constant 9.99999974E-6 : f32
    %336 = vector.broadcast %cst_135 : f32 to vector<8x1xf32>
    %337 = arith.addf %335, %336 : vector<8x1xf32>
    %338 = math.rsqrt %337 : vector<8x1xf32>
    %339 = vector.broadcast %338 : vector<8x1xf32> to vector<8x128xf32>
    %340 = arith.mulf %330, %339 : vector<8x128xf32>
    %341 = vector.broadcast %323 : vector<1x128xf32> to vector<8x128xf32>
    %342 = arith.mulf %340, %341 : vector<8x128xf32>
    %343 = vector.broadcast %324 : vector<1x128xf32> to vector<8x128xf32>
    %344 = arith.addf %342, %343 : vector<8x128xf32>
    %345 = arith.truncf %344 : vector<8x128xf32> to vector<8x128xbf16>
    %c2_136 = arith.constant 2 : index
    %c0_137 = arith.constant 0 : index
    %c0_138 = arith.constant 0 : index
    %346 = vector.load %arg7[%c2_136, %c0_137, %c0_138] : memref<3x128x128xbf16, #tpu.memory_space<vmem>>, vector<1x128x128xbf16>
    %347 = vector.shape_cast %346 : vector<1x128x128xbf16> to vector<128x128xbf16>
    %cst_139 = arith.constant dense<0.000000e+00> : vector<8x128xf32>
    %348 = tpu.matmul %345, %347, %cst_139 {dimension_numbers = #tpu.dot_dimension_numbers<[1], [0], [0], [1], [0, 0, 1, 1], [], []>} : vector<8x128xbf16>, vector<128x128xbf16>, vector<8x128xf32> -> vector<8x128xf32>
    %349 = arith.addf %233, %348 : vector<8x128xf32>
    %c0_140 = arith.constant 0 : index
    %c0_141 = arith.constant 0 : index
    %350 = vector.load %arg8[%c0_140, %c0_141] : memref<1x128xf32, #tpu.memory_space<vmem>>, vector<1x128xf32>
    %351 = vector.broadcast %350 : vector<1x128xf32> to vector<8x128xf32>
    %352 = arith.addf %349, %351 : vector<8x128xf32>
    %c0_142 = arith.constant 0 : index
    %c0_143 = arith.constant 0 : index
    %353 = vector.load %arg9[%c0_142, %c0_143] : memref<8x128xf32, #tpu.memory_space<vmem>>, vector<8x128xf32>
    tpu.vector_store %arg9[%c0_142, %c0_143], %352 {strides = array<i32>} : memref<8x128xf32, #tpu.memory_space<vmem>>, vector<8x128xf32>,
    return
  }
  func.func @transform_0(%arg0: i32) -> (i32, i32) {
    %c0_i32 = arith.constant 0 : i32
    %c0_i32_0 = arith.constant 0 : i32
    return %arg0, %c0_i32 : i32, i32
  }
  func.func @transform_1(%arg0: i32) -> (i32, i32, i32) {
    %c0_i32 = arith.constant 0 : i32
    %c0_i32_0 = arith.constant 0 : i32
    %c0_i32_1 = arith.constant 0 : i32
    %c0_i32_2 = arith.constant 0 : i32
    return %c0_i32, %c0_i32_0, %c0_i32_1 : i32, i32, i32
  }
  func.func @transform_2(%arg0: i32) -> (i32, i32, i32) {
    %c0_i32 = arith.constant 0 : i32
    %c0_i32_0 = arith.constant 0 : i32
    %c0_i32_1 = arith.constant 0 : i32
    %c0_i32_2 = arith.constant 0 : i32
    return %c0_i32, %c0_i32_0, %c0_i32_1 : i32, i32, i32
  }
  func.func @transform_3(%arg0: i32) -> (i32, i32, i32) {
    %c0_i32 = arith.constant 0 : i32
    %c0_i32_0 = arith.constant 0 : i32
    %c0_i32_1 = arith.constant 0 : i32
    %c0_i32_2 = arith.constant 0 : i32
    return %c0_i32, %c0_i32_0, %c0_i32_1 : i32, i32, i32
  }
  func.func @transform_4(%arg0: i32) -> (i32, i32, i32) {
    %c0_i32 = arith.constant 0 : i32
    %c0_i32_0 = arith.constant 0 : i32
    %c0_i32_1 = arith.constant 0 : i32
    %c0_i32_2 = arith.constant 0 : i32
    return %c0_i32, %c0_i32_0, %c0_i32_1 : i32, i32, i32
  }
  func.func @transform_5(%arg0: i32) -> (i32, i32, i32) {
    %c0_i32 = arith.constant 0 : i32
    %c0_i32_0 = arith.constant 0 : i32
    %c0_i32_1 = arith.constant 0 : i32
    %c0_i32_2 = arith.constant 0 : i32
    return %c0_i32, %c0_i32_0, %c0_i32_1 : i32, i32, i32
  }
  func.func @transform_6(%arg0: i32) -> (i32, i32, i32) {
    %c0_i32 = arith.constant 0 : i32
    %c0_i32_0 = arith.constant 0 : i32
    %c0_i32_1 = arith.constant 0 : i32
    %c0_i32_2 = arith.constant 0 : i32
    return %c0_i32, %c0_i32_0, %c0_i32_1 : i32, i32, i32
  }
  func.func @transform_7(%arg0: i32) -> (i32, i32) {
    %c0_i32 = arith.constant 0 : i32
    %c0_i32_0 = arith.constant 0 : i32
    %c0_i32_1 = arith.constant 0 : i32
    return %c0_i32, %c0_i32_0 : i32, i32
  }
  func.func @transform_8(%arg0: i32) -> (i32, i32) {
    %c0_i32 = arith.constant 0 : i32
    %c0_i32_0 = arith.constant 0 : i32
    return %arg0, %c0_i32 : i32, i32
  }
}

</mosaic_0001>

<llo_original>
// kernel: tpu_custom_call.1
$region0: #{tpu_custom_call.1}
  #allocation0 [shape = 'u32[]', space=smem, size = 0x4, offset = 0x4, fixed_abs, tag = 'smem constant byte address 0x4 - core index']
  #allocation1 [shape = 'u32[144,128]{1,0:T(1,128)}', space=vmem, size = 0x12000, scoped, tag = 'internal scratch']
  %s0 = inlined_call_operand.hbm [shape: f32[8,128], index: 0, kind: input, shape index: {}]
  %s1 = inlined_call_operand.hbm [shape: f32[3,2,128], index: 1, kind: input, shape index: {}]
  %s2 = inlined_call_operand.hbm [shape: bf16[3,128,128], index: 2, kind: input, shape index: {}]
  %s3 = inlined_call_operand.hbm [shape: f32[3,3,128], index: 3, kind: input, shape index: {}]
  %s4 = inlined_call_operand.hbm [shape: bf16[6,128,128], index: 4, kind: input, shape index: {}]
  %s5 = inlined_call_operand.hbm [shape: f32[6,3,128], index: 5, kind: input, shape index: {}]
  %s6 = inlined_call_operand.hbm [shape: bf16[3,128,128], index: 6, kind: input, shape index: {}]
  %s7 = inlined_call_operand.vmem [shape: f32[1,128], index: 7, kind: input, shape index: {}]
  %s8 = inlined_call_operand.hbm [shape: f32[8,128], index: 8, kind: output, shape index: {}]
  %s9 = sld [smem:[#allocation0]]
  $region70: #{tpu_custom_call.1} parent=0
    _
  %s11 = ssub.s32 1, %s9
  %s12 = scalar_select 0, %s11, %s9
  $region1: #{tpu_custom_call.1} parent=0
    #allocation2 [shape = 'u8[4096]{0}', space=vmem, size = 0x1000, scoped, tag = 'input window, operand 0, single buffered']
    #allocation3 [shape = 's32[1]{0}', space=sflag, size = 0x4, scoped, tag = 'scoped memory for tpu_custom_call.1']
    #allocation4 [shape = 's32[1]{0}', space=sflag, size = 0x4, scoped, tag = 'scoped memory for tpu_custom_call.1']
    #allocation5 [shape = 'u8[3072]{0}', space=vmem, size = 0xc00, scoped, tag = 'input window, operand 1, single buffered']
    #allocation6 [shape = 's32[1]{0}', space=sflag, size = 0x4, scoped, tag = 'scoped memory for tpu_custom_call.1']
    #allocation7 [shape = 'u8[98304]{0}', space=vmem, size = 0x18000, scoped, tag = 'input window, operand 2, single buffered']
    #allocation8 [shape = 'u8[6144]{0}', space=vmem, size = 0x1800, scoped, tag = 'input window, operand 3, single buffered']
    #allocation9 [shape = 's32[1]{0}', space=sflag, size = 0x4, scoped, tag = 'scoped memory for tpu_custom_call.1']
    #allocation10 [shape = 'u8[196608]{0}', space=vmem, size = 0x30000, scoped, tag = 'input window, operand 4, single buffered']
    #allocation11 [shape = 'u8[12288]{0}', space=vmem, size = 0x3000, scoped, tag = 'input window, operand 5, single buffered']
    #allocation12 [shape = 's32[1]{0}', space=sflag, size = 0x4, scoped, tag = 'scoped memory for tpu_custom_call.1']
    #allocation13 [shape = 'u8[98304]{0}', space=vmem, size = 0x18000, scoped, tag = 'input window, operand 6, single buffered']
    #allocation14 [shape = 'u8[4096]{0}', space=vmem, size = 0x1000, scoped, tag = 'output window, operand 0, single buffered']
    %13 = vsyncpa [#allocation3], 0
    %14 = vsyncpa [#allocation6], 0
    %15 = vsyncpa [#allocation9], 0
    %16 = vsyncpa [#allocation12], 0
    %17 = vsyncpa [#allocation4], 0
    // Predicated region
    $region2: #{tpu_custom_call.1} parent=1 // pred_check
      _
    $region3: #{tpu_custom_call.1} parent=1 // pred_check_branch
      %19 = sbr.rel (0) target = $region5
    $region4: #{tpu_custom_call.1} parent=1 // pred_region
      %s21 = ssub.s32 128, 128
      %22 = vsyncadd [#allocation3], %s21
      %s24 = sshll.u32 [#allocation2], 4
      %s25 = int_to_ptr.vmem [resolvable:$true] %s24
      %27 = dma.hbm_to_vmem [thread:$0]  %s0, 128, %s25, [#allocation3]
    $region5: #{tpu_custom_call.1} parent=1 // pred_fallthru
      _
    // Predicated region
    $region6: #{tpu_custom_call.1} parent=1 // pred_check
      _
    $region7: #{tpu_custom_call.1} parent=1 // pred_check_branch
      %29 = sbr.rel (0) target = $region9
    $region8: #{tpu_custom_call.1} parent=1 // pred_region
      %s31 = ssub.s32 96, 96
      %32 = vsyncadd [#allocation6], %s31
      %s33 = sshll.u32 [#allocation5], 4
      %s34 = int_to_ptr.vmem [resolvable:$true] %s33
      %39 = dma.hbm_to_vmem [thread:$0]  %s1, 96, %s34, [#allocation6], 32, 32, 2
    $region9: #{tpu_custom_call.1} parent=1 // pred_fallthru
      _
    // Predicated region
    $region10: #{tpu_custom_call.1} parent=1 // pred_check
      _
    $region11: #{tpu_custom_call.1} parent=1 // pred_check_branch
      %41 = sbr.rel (0) target = $region13
    $region12: #{tpu_custom_call.1} parent=1 // pred_region
      %s43 = ssub.s32 3072, 3072
      %44 = vsyncadd [#allocation6], %s43
      %s45 = sshll.u32 [#allocation7], 4
      %s46 = int_to_ptr.vmem [resolvable:$true] %s45
      %51 = dma.hbm_to_vmem [thread:$0]  %s2, 3072, %s46, [#allocation6], 64, 64, 4
    $region13: #{tpu_custom_call.1} parent=1 // pred_fallthru
      _
    // Predicated region
    $region14: #{tpu_custom_call.1} parent=1 // pred_check
      _
    $region15: #{tpu_custom_call.1} parent=1 // pred_check_branch
      %53 = sbr.rel (0) target = $region17
    $region16: #{tpu_custom_call.1} parent=1 // pred_region
      %s55 = ssub.s32 192, 192
      %56 = vsyncadd [#allocation9], %s55
      %s57 = sshll.u32 [#allocation8], 4
      %s58 = int_to_ptr.vmem [resolvable:$true] %s57
      %63 = dma.hbm_to_vmem [thread:$0]  %s3, 192, %s58, [#allocation9], 64, 64, 4
    $region17: #{tpu_custom_call.1} parent=1 // pred_fallthru
      _
    // Predicated region
    $region18: #{tpu_custom_call.1} parent=1 // pred_check
      _
    $region19: #{tpu_custom_call.1} parent=1 // pred_check_branch
      %65 = sbr.rel (0) target = $region21
    $region20: #{tpu_custom_call.1} parent=1 // pred_region
      %s67 = ssub.s32 6144, 6144
      %68 = vsyncadd [#allocation9], %s67
      %s69 = sshll.u32 [#allocation10], 4
      %s70 = int_to_ptr.vmem [resolvable:$true] %s69
      %75 = dma.hbm_to_vmem [thread:$0]  %s4, 6144, %s70, [#allocation9], 64, 64, 4
    $region21: #{tpu_custom_call.1} parent=1 // pred_fallthru
      _
    // Predicated region
    $region22: #{tpu_custom_call.1} parent=1 // pred_check
      _
    $region23: #{tpu_custom_call.1} parent=1 // pred_check_branch
      %77 = sbr.rel (0) target = $region25
    $region24: #{tpu_custom_call.1} parent=1 // pred_region
      %s79 = ssub.s32 384, 384
      %80 = vsyncadd [#allocation12], %s79
      %s81 = sshll.u32 [#allocation11], 4
      %s82 = int_to_ptr.vmem [resolvable:$true] %s81
      %87 = dma.hbm_to_vmem [thread:$0]  %s5, 384, %s82, [#allocation12], 64, 64, 4
    $region25: #{tpu_custom_call.1} parent=1 // pred_fallthru
      _
    // Predicated region
    $region26: #{tpu_custom_call.1} parent=1 // pred_check
      _
    $region27: #{tpu_custom_call.1} parent=1 // pred_check_branch
      %89 = sbr.rel (0) target = $region29
    $region28: #{tpu_custom_call.1} parent=1 // pred_region
      %s91 = ssub.s32 3072, 3072
      %92 = vsyncadd [#allocation12], %s91
      %s93 = sshll.u32 [#allocation13], 4
      %s94 = int_to_ptr.vmem [resolvable:$true] %s93
      %99 = dma.hbm_to_vmem [thread:$0]  %s6, 3072, %s94, [#allocation12], 64, 64, 4
    $region29: #{tpu_custom_call.1} parent=1 // pred_fallthru
      _
    // Predicated region
    $region30: #{tpu_custom_call.1} parent=1 // pred_check
      _
    $region31: #{tpu_custom_call.1} parent=1 // pred_check_branch
      %101 = sbr.rel (0) target = $region33
    $region32: #{tpu_custom_call.1} parent=1 // pred_region
      _
    $region33: #{tpu_custom_call.1} parent=1 // pred_fallthru
      _
    // Predicated region
    $region34: #{tpu_custom_call.1} parent=1 // pred_check
      _
    $region35: #{tpu_custom_call.1} parent=1 // pred_check_branch
      %103 = sbr.rel (0) target = $region37
    $region36: #{tpu_custom_call.1} parent=1 // pred_region
      %104 = dma.done [#allocation3], 128
    $region37: #{tpu_custom_call.1} parent=1 // pred_fallthru
      _
    // Predicated region
    $region38: #{tpu_custom_call.1} parent=1 // pred_check
      _
    $region39: #{tpu_custom_call.1} parent=1 // pred_check_branch
      %106 = sbr.rel (0) target = $region41
    $region40: #{tpu_custom_call.1} parent=1 // pred_region
      %107 = dma.done [#allocation6], 96
    $region41: #{tpu_custom_call.1} parent=1 // pred_fallthru
      _
    // Predicated region
    $region42: #{tpu_custom_call.1} parent=1 // pred_check
      _
    $region43: #{tpu_custom_call.1} parent=1 // pred_check_branch
      %109 = sbr.rel (0) target = $region45
    $region44: #{tpu_custom_call.1} parent=1 // pred_region
      %110 = dma.done [#allocation6], 3072
    $region45: #{tpu_custom_call.1} parent=1 // pred_fallthru
      _
    // Predicated region
    $region46: #{tpu_custom_call.1} parent=1 // pred_check
      _
    $region47: #{tpu_custom_call.1} parent=1 // pred_check_branch
      %112 = sbr.rel (0) target = $region49
    $region48: #{tpu_custom_call.1} parent=1 // pred_region
      %113 = dma.done [#allocation9], 192
    $region49: #{tpu_custom_call.1} parent=1 // pred_fallthru
      _
    // Predicated region
    $region50: #{tpu_custom_call.1} parent=1 // pred_check
      _
    $region51: #{tpu_custom_call.1} parent=1 // pred_check_branch
      %115 = sbr.rel (0) target = $region53
    $region52: #{tpu_custom_call.1} parent=1 // pred_region
      %116 = dma.done [#allocation9], 6144
    $region53: #{tpu_custom_call.1} parent=1 // pred_fallthru
      _
    // Predicated region
    $region54: #{tpu_custom_call.1} parent=1 // pred_check
      _
    $region55: #{tpu_custom_call.1} parent=1 // pred_check_branch
      %118 = sbr.rel (0) target = $region57
    $region56: #{tpu_custom_call.1} parent=1 // pred_region
      %119 = dma.done [#allocation12], 384
    $region57: #{tpu_custom_call.1} parent=1 // pred_fallthru
      _
    // Predicated region
    $region58: #{tpu_custom_call.1} parent=1 // pred_check
      _
    $region59: #{tpu_custom_call.1} parent=1 // pred_check_branch
      %121 = sbr.rel (0) target = $region61
    $region60: #{tpu_custom_call.1} parent=1 // pred_region
      %122 = dma.done [#allocation12], 3072
    $region61: #{tpu_custom_call.1} parent=1 // pred_fallthru
      _
    %v124 = vld [vmem:[#allocation2] sm:$0xff]
    %v125 = vld [vmem:[#allocation5] sm:$0x3]
    %v126 = vlaneseq
    %v127 = vshrl.u32 %v126, 7
    %v128 = vsub.s32 0, %v127
    %v129 = vrot.slane %v125, %v128
    %v130 = vsub.f32 %v124, %v129
    %v131 = vlaneseq
    %v132 = vshrl.u32 %v131, 7
    %v133 = vsub.s32 1, %v132
    %v134 = vrot.slane %v125, %v133
    %v135 = vmul.f32 %v130, %v134
    %v136 = vmax.f32 %v135, -10.0
    %v137 = vmin.f32 %v136, 10.0
    %v138 = vld [vmem:[#allocation8] sm:$0x7]
    %v139 = vpack.c.bf16 %v137, %v137
    %v140 = vld [vmem:[#allocation7] sm:$0xf]
    %v141 = vld [vmem:[#allocation7 + $0x4] sm:$0xf]
    %v142 = vld [vmem:[#allocation7 + $0x8] sm:$0xf]
    %v143 = vld [vmem:[#allocation7 + $0xc] sm:$0xf]
    %v144 = vld [vmem:[#allocation7 + $0x10] sm:$0xf]
    %v145 = vld [vmem:[#allocation7 + $0x14] sm:$0xf]
    %v146 = vld [vmem:[#allocation7 + $0x18] sm:$0xf]
    %v147 = vld [vmem:[#allocation7 + $0x1c] sm:$0xf]
    %v148 = vld [vmem:[#allocation7 + $0x20] sm:$0xf]
    %v149 = vld [vmem:[#allocation7 + $0x24] sm:$0xf]
    %v150 = vld [vmem:[#allocation7 + $0x28] sm:$0xf]
    %v151 = vld [vmem:[#allocation7 + $0x2c] sm:$0xf]
    %v152 = vld [vmem:[#allocation7 + $0x30] sm:$0xf]
    %v153 = vld [vmem:[#allocation7 + $0x34] sm:$0xf]
    %v154 = vld [vmem:[#allocation7 + $0x38] sm:$0xf]
    %v155 = vld [vmem:[#allocation7 + $0x3c] sm:$0xf]
    %v156 = vlaneseq
    %v157 = vshrl.u32 %v156, 7
    %v158 = vsub.s32 0, %v157
    %v159 = vrot.slane %v138, %v158
    %v176 = vunpack.c.l.b16 %v140
    %v177 = vunpack.c.l.b16 %v141
    %v178 = vunpack.c.l.b16 %v142
    %v179 = vunpack.c.l.b16 %v143
    %v180 = vunpack.c.l.b16 %v144
    %v181 = vunpack.c.l.b16 %v145
    %v182 = vunpack.c.l.b16 %v146
    %v183 = vunpack.c.l.b16 %v147
    %v184 = vunpack.c.l.b16 %v148
    %v185 = vunpack.c.l.b16 %v149
    %v186 = vunpack.c.l.b16 %v150
    %v187 = vunpack.c.l.b16 %v151
    %v188 = vunpack.c.l.b16 %v152
    %v189 = vunpack.c.l.b16 %v153
    %v190 = vunpack.c.l.b16 %v154
    %v191 = vunpack.c.l.b16 %v155
    %v192 = vpack.c.b16 %v177, %v176
    %v193 = vpack.c.b16 %v179, %v178
    %v194 = vpack.c.b16 %v181, %v180
    %v195 = vpack.c.b16 %v183, %v182
    %v196 = vpack.c.b16 %v185, %v184
    %v197 = vpack.c.b16 %v187, %v186
    %v198 = vpack.c.b16 %v189, %v188
    %v199 = vpack.c.b16 %v191, %v190
    %208 = vmatprep.subr.bf16.mxu0 0
    %209 = vmatpush1.bf16.msra.mxu0 %v199
    %210 = vmatprep.subr.bf16.mxu0 0
    %211 = vmatpush1.bf16.msra.mxu0 %v198
    %212 = vmatprep.subr.bf16.mxu0 0
    %213 = vmatpush1.bf16.msra.mxu0 %v197
    %214 = vmatprep.subr.bf16.mxu0 0
    %215 = vmatpush1.bf16.msra.mxu0 %v196
    %216 = vmatprep.subr.bf16.mxu0 0
    %217 = vmatpush1.bf16.msra.mxu0 %v195
    %218 = vmatprep.subr.bf16.mxu0 0
    %219 = vmatpush1.bf16.msra.mxu0 %v194
    %220 = vmatprep.subr.bf16.mxu0 0
    %221 = vmatpush1.bf16.msra.mxu0 %v193
    %222 = vmatprep.subr.bf16.mxu0 0
    %223 = vmatpush1.bf16.msra.mxu0 %v192
    %224 = vmatprep.subr.bf16.mxu0 0
    %225 = vmatpush2.bf16.msra.mxu0 0
    %226 = vmatprep.subr.bf16.mxu0 0
    %227 = vmatpush2.bf16.msra.mxu0 0
    %228 = vmatprep.subr.bf16.mxu0 0
    %229 = vmatpush2.bf16.msra.mxu0 0
    %230 = vmatprep.subr.bf16.mxu0 0
    %231 = vmatpush2.bf16.msra.mxu0 0
    %232 = vmatprep.subr.bf16.mxu0 0
    %233 = vmatpush2.bf16.msra.mxu0 0
    %234 = vmatprep.subr.bf16.mxu0 0
    %235 = vmatpush2.bf16.msra.mxu0 0
    %236 = vmatprep.subr.bf16.mxu0 0
    %237 = vmatpush2.bf16.msra.mxu0 0
    %238 = vmatprep.subr.bf16.mxu0 0
    %239 = vmatpush2.bf16.msra.mxu0 0
    %240 = vmatprep.mubr.bf16.mxu0 0
    %241 = vmatmul.mubr.bf16.gmra.mxu0 %v139
    %v242 = vpop.f32.mrf.mxu0
    %v243 = vadd.f32 %v159, %v242
    %v244 = vpop.f32.mrf.mxu0
    %v245 = vpop.f32.mrf.mxu0
    %v246 = vpop.f32.mrf.mxu0
    %247 = vdwg.mxu0
    %v248 = vmax.f32 %v243, 0.0
    %249 = vadd.xlane.f32.xlu0 %v248
    %v250 = vpop.xlane.xlu0 %249
    %v251 = vrcp.pop 128.0
    %v252 = vmul.f32 %v250, %v251
    %v253 = vsub.f32 %v248, %v252
    %v254 = vmul.f32 %v253, %v253
    %255 = vadd.xlane.f32.xlu0 %v254
    %v256 = vpop.xlane.xlu0 %255
    %v257 = vmul.f32 %v256, %v251
    %v258 = vadd.f32 %v257, 1e-05
    %v259 = vrsqrt.pop %v258
    %v260 = vmul.f32 %v253, %v259
    %v261 = vlaneseq
    %v262 = vshrl.u32 %v261, 7
    %v263 = vsub.s32 1, %v262
    %v264 = vrot.slane %v138, %v263
    %v265 = vmul.f32 %v260, %v264
    %v266 = vlaneseq
    %v267 = vshrl.u32 %v266, 7
    %v268 = vsub.s32 2, %v267
    %v269 = vrot.slane %v138, %v268
    %v270 = vadd.f32 %v265, %v269
    %v271 = vld [vmem:[#allocation11] sm:$0x7]
    %v272 = vpack.c.bf16 %v270, %v270
    %v273 = vld [vmem:[#allocation10] sm:$0xf]
    %v274 = vld [vmem:[#allocation10 + $0x4] sm:$0xf]
    %v275 = vld [vmem:[#allocation10 + $0x8] sm:$0xf]
    %v276 = vld [vmem:[#allocation10 + $0xc] sm:$0xf]
    %v277 = vld [vmem:[#allocation10 + $0x10] sm:$0xf]
    %v278 = vld [vmem:[#allocation10 + $0x14] sm:$0xf]
    %v279 = vld [vmem:[#allocation10 + $0x18] sm:$0xf]
    %v280 = vld [vmem:[#allocation10 + $0x1c] sm:$0xf]
    %v281 = vld [vmem:[#allocation10 + $0x20] sm:$0xf]
    %v282 = vld [vmem:[#allocation10 + $0x24] sm:$0xf]
    %v283 = vld [vmem:[#allocation10 + $0x28] sm:$0xf]
    %v284 = vld [vmem:[#allocation10 + $0x2c] sm:$0xf]
    %v285 = vld [vmem:[#allocation10 + $0x30] sm:$0xf]
    %v286 = vld [vmem:[#allocation10 + $0x34] sm:$0xf]
    %v287 = vld [vmem:[#allocation10 + $0x38] sm:$0xf]
    %v288 = vld [vmem:[#allocation10 + $0x3c] sm:$0xf]
    %v289 = vlaneseq
    %v290 = vshrl.u32 %v289, 7
    %v291 = vsub.s32 0, %v290
    %v292 = vrot.slane %v271, %v291
    %v309 = vunpack.c.l.b16 %v273
    %v310 = vunpack.c.l.b16 %v274
    %v311 = vunpack.c.l.b16 %v275
    %v312 = vunpack.c.l.b16 %v276
    %v313 = vunpack.c.l.b16 %v277
    %v314 = vunpack.c.l.b16 %v278
    %v315 = vunpack.c.l.b16 %v279
    %v316 = vunpack.c.l.b16 %v280
    %v317 = vunpack.c.l.b16 %v281
    %v318 = vunpack.c.l.b16 %v282
    %v319 = vunpack.c.l.b16 %v283
    %v320 = vunpack.c.l.b16 %v284
    %v321 = vunpack.c.l.b16 %v285
    %v322 = vunpack.c.l.b16 %v286
    %v323 = vunpack.c.l.b16 %v287
    %v324 = vunpack.c.l.b16 %v288
    %v325 = vpack.c.b16 %v310, %v309
    %v326 = vpack.c.b16 %v312, %v311
    %v327 = vpack.c.b16 %v314, %v313
    %v328 = vpack.c.b16 %v316, %v315
    %v329 = vpack.c.b16 %v318, %v317
    %v330 = vpack.c.b16 %v320, %v319
    %v331 = vpack.c.b16 %v322, %v321
    %v332 = vpack.c.b16 %v324, %v323
    %341 = vmatprep.subr.bf16.mxu0 0
    %342 = vmatpush1.bf16.msra.mxu0 %v332
    %343 = vmatprep.subr.bf16.mxu0 0
    %344 = vmatpush1.bf16.msra.mxu0 %v331
    %345 = vmatprep.subr.bf16.mxu0 0
    %346 = vmatpush1.bf16.msra.mxu0 %v330
    %347 = vmatprep.subr.bf16.mxu0 0
    %348 = vmatpush1.bf16.msra.mxu0 %v329
    %349 = vmatprep.subr.bf16.mxu0 0
    %350 = vmatpush1.bf16.msra.mxu0 %v328
    %351 = vmatprep.subr.bf16.mxu0 0
    %352 = vmatpush1.bf16.msra.mxu0 %v327
    %353 = vmatprep.subr.bf16.mxu0 0
    %354 = vmatpush1.bf16.msra.mxu0 %v326
    %355 = vmatprep.subr.bf16.mxu0 0
    %356 = vmatpush1.bf16.msra.mxu0 %v325
    %357 = vmatprep.subr.bf16.mxu0 0
    %358 = vmatpush2.bf16.msra.mxu0 0
    %359 = vmatprep.subr.bf16.mxu0 0
    %360 = vmatpush2.bf16.msra.mxu0 0
    %361 = vmatprep.subr.bf16.mxu0 0
    %362 = vmatpush2.bf16.msra.mxu0 0
    %363 = vmatprep.subr.bf16.mxu0 0
    %364 = vmatpush2.bf16.msra.mxu0 0
    %365 = vmatprep.subr.bf16.mxu0 0
    %366 = vmatpush2.bf16.msra.mxu0 0
    %367 = vmatprep.subr.bf16.mxu0 0
    %368 = vmatpush2.bf16.msra.mxu0 0
    %369 = vmatprep.subr.bf16.mxu0 0
    %370 = vmatpush2.bf16.msra.mxu0 0
    %371 = vmatprep.subr.bf16.mxu0 0
    %372 = vmatpush2.bf16.msra.mxu0 0
    %373 = vmatprep.mubr.bf16.mxu0 0
    %374 = vmatmul.mubr.bf16.gmra.mxu0 %v272
    %v375 = vpop.f32.mrf.mxu0
    %v376 = vadd.f32 %v292, %v375
    %v377 = vpop.f32.mrf.mxu0
    %v378 = vpop.f32.mrf.mxu0
    %v379 = vpop.f32.mrf.mxu0
    %380 = vdwg.mxu0
    %v381 = vmax.f32 %v376, 0.0
    %382 = vadd.xlane.f32.xlu0 %v381
    %v383 = vpop.xlane.xlu0 %382
    %v384 = vmul.f32 %v383, %v251
    %v385 = vsub.f32 %v381, %v384
    %v386 = vmul.f32 %v385, %v385
    %387 = vadd.xlane.f32.xlu0 %v386
    %v388 = vpop.xlane.xlu0 %387
    %v389 = vmul.f32 %v388, %v251
    %v390 = vadd.f32 %v389, 1e-05
    %v391 = vrsqrt.pop %v390
    %v392 = vmul.f32 %v385, %v391
    %v393 = vlaneseq
    %v394 = vshrl.u32 %v393, 7
    %v395 = vsub.s32 1, %v394
    %v396 = vrot.slane %v271, %v395
    %v397 = vmul.f32 %v392, %v396
    %v398 = vlaneseq
    %v399 = vshrl.u32 %v398, 7
    %v400 = vsub.s32 2, %v399
    %v401 = vrot.slane %v271, %v400
    %v402 = vadd.f32 %v397, %v401
    %s403 = scalar_lea.vmem [#allocation11], 4
    %v404 = vld [vmem:[%s403] sm:$0x7]
    %v405 = vpack.c.bf16 %v402, %v402
    %s406 = scalar_lea.vmem [#allocation10], 64
    %v407 = vld [vmem:[%s406] sm:$0xf]
    %v408 = vld [vmem:[%s406 + $0x4] sm:$0xf]
    %v409 = vld [vmem:[%s406 + $0x8] sm:$0xf]
    %v410 = vld [vmem:[%s406 + $0xc] sm:$0xf]
    %v411 = vld [vmem:[%s406 + $0x10] sm:$0xf]
    %v412 = vld [vmem:[%s406 + $0x14] sm:$0xf]
    %v413 = vld [vmem:[%s406 + $0x18] sm:$0xf]
    %v414 = vld [vmem:[%s406 + $0x1c] sm:$0xf]
    %v415 = vld [vmem:[%s406 + $0x20] sm:$0xf]
    %v416 = vld [vmem:[%s406 + $0x24] sm:$0xf]
    %v417 = vld [vmem:[%s406 + $0x28] sm:$0xf]
    %v418 = vld [vmem:[%s406 + $0x2c] sm:$0xf]
    %v419 = vld [vmem:[%s406 + $0x30] sm:$0xf]
    %v420 = vld [vmem:[%s406 + $0x34] sm:$0xf]
    %v421 = vld [vmem:[%s406 + $0x38] sm:$0xf]
    %v422 = vld [vmem:[%s406 + $0x3c] sm:$0xf]
    %v423 = vlaneseq
    %v424 = vshrl.u32 %v423, 7
    %v425 = vsub.s32 0, %v424
    %v426 = vrot.slane %v404, %v425
    %v443 = vunpack.c.l.b16 %v407
    %v444 = vunpack.c.l.b16 %v408
    %v445 = vunpack.c.l.b16 %v409
    %v446 = vunpack.c.l.b16 %v410
    %v447 = vunpack.c.l.b16 %v411
    %v448 = vunpack.c.l.b16 %v412
    %v449 = vunpack.c.l.b16 %v413
    %v450 = vunpack.c.l.b16 %v414
    %v451 = vunpack.c.l.b16 %v415
    %v452 = vunpack.c.l.b16 %v416
    %v453 = vunpack.c.l.b16 %v417
    %v454 = vunpack.c.l.b16 %v418
    %v455 = vunpack.c.l.b16 %v419
    %v456 = vunpack.c.l.b16 %v420
    %v457 = vunpack.c.l.b16 %v421
    %v458 = vunpack.c.l.b16 %v422
    %v459 = vpack.c.b16 %v444, %v443
    %v460 = vpack.c.b16 %v446, %v445
    %v461 = vpack.c.b16 %v448, %v447
    %v462 = vpack.c.b16 %v450, %v449
    %v463 = vpack.c.b16 %v452, %v451
    %v464 = vpack.c.b16 %v454, %v453
    %v465 = vpack.c.b16 %v456, %v455
    %v466 = vpack.c.b16 %v458, %v457
    %475 = vmatprep.subr.bf16.mxu0 0
    %476 = vmatpush1.bf16.msra.mxu0 %v466
    %477 = vmatprep.subr.bf16.mxu0 0
    %478 = vmatpush1.bf16.msra.mxu0 %v465
    %479 = vmatprep.subr.bf16.mxu0 0
    %480 = vmatpush1.bf16.msra.mxu0 %v464
    %481 = vmatprep.subr.bf16.mxu0 0
    %482 = vmatpush1.bf16.msra.mxu0 %v463
    %483 = vmatprep.subr.bf16.mxu0 0
    %484 = vmatpush1.bf16.msra.mxu0 %v462
    %485 = vmatprep.subr.bf16.mxu0 0
    %486 = vmatpush1.bf16.msra.mxu0 %v461
    %487 = vmatprep.subr.bf16.mxu0 0
    %488 = vmatpush1.bf16.msra.mxu0 %v460
    %489 = vmatprep.subr.bf16.mxu0 0
    %490 = vmatpush1.bf16.msra.mxu0 %v459
    %491 = vmatprep.subr.bf16.mxu0 0
    %492 = vmatpush2.bf16.msra.mxu0 0
    %493 = vmatprep.subr.bf16.mxu0 0
    %494 = vmatpush2.bf16.msra.mxu0 0
    %495 = vmatprep.subr.bf16.mxu0 0
    %496 = vmatpush2.bf16.msra.mxu0 0
    %497 = vmatprep.subr.bf16.mxu0 0
    %498 = vmatpush2.bf16.msra.mxu0 0
    %499 = vmatprep.subr.bf16.mxu0 0
    %500 = vmatpush2.bf16.msra.mxu0 0
    %501 = vmatprep.subr.bf16.mxu0 0
    %502 = vmatpush2.bf16.msra.mxu0 0
    %503 = vmatprep.subr.bf16.mxu0 0
    %504 = vmatpush2.bf16.msra.mxu0 0
    %505 = vmatprep.subr.bf16.mxu0 0
    %506 = vmatpush2.bf16.msra.mxu0 0
    %507 = vmatprep.mubr.bf16.mxu0 0
    %508 = vmatmul.mubr.bf16.gmra.mxu0 %v405
    %v509 = vpop.f32.mrf.mxu0
    %v510 = vadd.f32 %v426, %v509
    %v511 = vpop.f32.mrf.mxu0
    %v512 = vpop.f32.mrf.mxu0
    %v513 = vpop.f32.mrf.mxu0
    %514 = vdwg.mxu0
    %v515 = vmax.f32 %v510, 0.0
    %516 = vadd.xlane.f32.xlu0 %v515
    %v517 = vpop.xlane.xlu0 %516
    %v518 = vmul.f32 %v517, %v251
    %v519 = vsub.f32 %v515, %v518
    %v520 = vmul.f32 %v519, %v519
    %521 = vadd.xlane.f32.xlu0 %v520
    %v522 = vpop.xlane.xlu0 %521
    %v523 = vmul.f32 %v522, %v251
    %v524 = vadd.f32 %v523, 1e-05
    %v525 = vrsqrt.pop %v524
    %v526 = vmul.f32 %v519, %v525
    %v527 = vlaneseq
    %v528 = vshrl.u32 %v527, 7
    %v529 = vsub.s32 1, %v528
    %v530 = vrot.slane %v404, %v529
    %v531 = vmul.f32 %v526, %v530
    %v532 = vlaneseq
    %v533 = vshrl.u32 %v532, 7
    %v534 = vsub.s32 2, %v533
    %v535 = vrot.slane %v404, %v534
    %v536 = vadd.f32 %v531, %v535
    %v537 = vpack.c.bf16 %v536, %v536
    %v538 = vld [vmem:[#allocation13] sm:$0xf]
    %v539 = vld [vmem:[#allocation13 + $0x4] sm:$0xf]
    %v540 = vld [vmem:[#allocation13 + $0x8] sm:$0xf]
    %v541 = vld [vmem:[#allocation13 + $0xc] sm:$0xf]
    %v542 = vld [vmem:[#allocation13 + $0x10] sm:$0xf]
    %v543 = vld [vmem:[#allocation13 + $0x14] sm:$0xf]
    %v544 = vld [vmem:[#allocation13 + $0x18] sm:$0xf]
    %v545 = vld [vmem:[#allocation13 + $0x1c] sm:$0xf]
    %v546 = vld [vmem:[#allocation13 + $0x20] sm:$0xf]
    %v547 = vld [vmem:[#allocation13 + $0x24] sm:$0xf]
    %v548 = vld [vmem:[#allocation13 + $0x28] sm:$0xf]
    %v549 = vld [vmem:[#allocation13 + $0x2c] sm:$0xf]
    %v550 = vld [vmem:[#allocation13 + $0x30] sm:$0xf]
    %v551 = vld [vmem:[#allocation13 + $0x34] sm:$0xf]
    %v552 = vld [vmem:[#allocation13 + $0x38] sm:$0xf]
    %v553 = vld [vmem:[#allocation13 + $0x3c] sm:$0xf]
    %s554 = scalar_lea.vmem [#allocation5], 2
    %v555 = vld [vmem:[%s554] sm:$0x3]
    %v556 = vlaneseq
    %v557 = vshrl.u32 %v556, 7
    %v558 = vsub.s32 0, %v557
    %v559 = vrot.slane %v555, %v558
    %v560 = vsub.f32 %v124, %v559
    %v561 = vlaneseq
    %v562 = vshrl.u32 %v561, 7
    %v563 = vsub.s32 1, %v562
    %v564 = vrot.slane %v555, %v563
    %v565 = vmul.f32 %v560, %v564
    %v566 = vmax.f32 %v565, -10.0
    %v567 = vmin.f32 %v566, 10.0
    %s568 = scalar_lea.vmem [#allocation8], 4
    %v569 = vld [vmem:[%s568] sm:$0x7]
    %v570 = vpack.c.bf16 %v567, %v567
    %s571 = scalar_lea.vmem [#allocation7], 64
    %v572 = vld [vmem:[%s571] sm:$0xf]
    %v573 = vld [vmem:[%s571 + $0x4] sm:$0xf]
    %v574 = vld [vmem:[%s571 + $0x8] sm:$0xf]
    %v575 = vld [vmem:[%s571 + $0xc] sm:$0xf]
    %v576 = vld [vmem:[%s571 + $0x10] sm:$0xf]
    %v577 = vld [vmem:[%s571 + $0x14] sm:$0xf]
    %v578 = vld [vmem:[%s571 + $0x18] sm:$0xf]
    %v579 = vld [vmem:[%s571 + $0x1c] sm:$0xf]
    %v580 = vld [vmem:[%s571 + $0x20] sm:$0xf]
    %v581 = vld [vmem:[%s571 + $0x24] sm:$0xf]
    %v582 = vld [vmem:[%s571 + $0x28] sm:$0xf]
    %v583 = vld [vmem:[%s571 + $0x2c] sm:$0xf]
    %v584 = vld [vmem:[%s571 + $0x30] sm:$0xf]
    %v585 = vld [vmem:[%s571 + $0x34] sm:$0xf]
    %v586 = vld [vmem:[%s571 + $0x38] sm:$0xf]
    %v587 = vld [vmem:[%s571 + $0x3c] sm:$0xf]
    %v588 = vlaneseq
    %v589 = vshrl.u32 %v588, 7
    %v590 = vsub.s32 0, %v589
    %v591 = vrot.slane %v569, %v590
    %v608 = vunpack.c.l.b16 %v572
    %v609 = vunpack.c.l.b16 %v573
    %v610 = vunpack.c.l.b16 %v574
    %v611 = vunpack.c.l.b16 %v575
    %v612 = vunpack.c.l.b16 %v576
    %v613 = vunpack.c.l.b16 %v577
    %v614 = vunpack.c.l.b16 %v578
    %v615 = vunpack.c.l.b16 %v579
    %v616 = vunpack.c.l.b16 %v580
    %v617 = vunpack.c.l.b16 %v581
    %v618 = vunpack.c.l.b16 %v582
    %v619 = vunpack.c.l.b16 %v583
    %v620 = vunpack.c.l.b16 %v584
    %v621 = vunpack.c.l.b16 %v585
    %v622 = vunpack.c.l.b16 %v586
    %v623 = vunpack.c.l.b16 %v587
    %v624 = vpack.c.b16 %v609, %v608
    %v625 = vpack.c.b16 %v611, %v610
    %v626 = vpack.c.b16 %v613, %v612
    %v627 = vpack.c.b16 %v615, %v614
    %v628 = vpack.c.b16 %v617, %v616
    %v629 = vpack.c.b16 %v619, %v618
    %v630 = vpack.c.b16 %v621, %v620
    %v631 = vpack.c.b16 %v623, %v622
    %640 = vmatprep.subr.bf16.mxu0 0
    %641 = vmatpush1.bf16.msra.mxu0 %v631
    %642 = vmatprep.subr.bf16.mxu0 0
    %643 = vmatpush1.bf16.msra.mxu0 %v630
    %644 = vmatprep.subr.bf16.mxu0 0
    %645 = vmatpush1.bf16.msra.mxu0 %v629
    %646 = vmatprep.subr.bf16.mxu0 0
    %647 = vmatpush1.bf16.msra.mxu0 %v628
    %648 = vmatprep.subr.bf16.mxu0 0
    %649 = vmatpush1.bf16.msra.mxu0 %v627
    %650 = vmatprep.subr.bf16.mxu0 0
    %651 = vmatpush1.bf16.msra.mxu0 %v626
    %652 = vmatprep.subr.bf16.mxu0 0
    %653 = vmatpush1.bf16.msra.mxu0 %v625
    %654 = vmatprep.subr.bf16.mxu0 0
    %655 = vmatpush1.bf16.msra.mxu0 %v624
    %656 = vmatprep.subr.bf16.mxu0 0
    %657 = vmatpush2.bf16.msra.mxu0 0
    %658 = vmatprep.subr.bf16.mxu0 0
    %659 = vmatpush2.bf16.msra.mxu0 0
    %660 = vmatprep.subr.bf16.mxu0 0
    %661 = vmatpush2.bf16.msra.mxu0 0
    %662 = vmatprep.subr.bf16.mxu0 0
    %663 = vmatpush2.bf16.msra.mxu0 0
    %664 = vmatprep.subr.bf16.mxu0 0
    %665 = vmatpush2.bf16.msra.mxu0 0
    %666 = vmatprep.subr.bf16.mxu0 0
    %667 = vmatpush2.bf16.msra.mxu0 0
    %668 = vmatprep.subr.bf16.mxu0 0
    %669 = vmatpush2.bf16.msra.mxu0 0
    %670 = vmatprep.subr.bf16.mxu0 0
    %671 = vmatpush2.bf16.msra.mxu0 0
    %672 = vmatprep.mubr.bf16.mxu0 0
    %673 = vmatmul.mubr.bf16.gmra.mxu0 %v570
    %v674 = vpop.f32.mrf.mxu0
    %v675 = vadd.f32 %v591, %v674
    %v676 = vpop.f32.mrf.mxu0
    %v677 = vpop.f32.mrf.mxu0
    %v678 = vpop.f32.mrf.mxu0
    %679 = vdwg.mxu0
    %v680 = vmax.f32 %v675, 0.0
    %681 = vadd.xlane.f32.xlu0 %v680
    %v682 = vpop.xlane.xlu0 %681
    %v683 = vmul.f32 %v682, %v251
    %v684 = vsub.f32 %v680, %v683
    %v685 = vmul.f32 %v684, %v684
    %686 = vadd.xlane.f32.xlu0 %v685
    %v687 = vpop.xlane.xlu0 %686
    %v688 = vmul.f32 %v687, %v251
    %v689 = vadd.f32 %v688, 1e-05
    %v690 = vrsqrt.pop %v689
    %v691 = vmul.f32 %v684, %v690
    %v692 = vlaneseq
    %v693 = vshrl.u32 %v692, 7
    %v694 = vsub.s32 1, %v693
    %v695 = vrot.slane %v569, %v694
    %v696 = vmul.f32 %v691, %v695
    %v697 = vlaneseq
    %v698 = vshrl.u32 %v697, 7
    %v699 = vsub.s32 2, %v698
    %v700 = vrot.slane %v569, %v699
    %v701 = vadd.f32 %v696, %v700
    %s702 = scalar_lea.vmem [#allocation11], 8
    %v703 = vld [vmem:[%s702] sm:$0x7]
    %v704 = vpack.c.bf16 %v701, %v701
    %s705 = scalar_lea.vmem [#allocation10], 128
    %v706 = vld [vmem:[%s705] sm:$0xf]
    %v707 = vld [vmem:[%s705 + $0x4] sm:$0xf]
    %v708 = vld [vmem:[%s705 + $0x8] sm:$0xf]
    %v709 = vld [vmem:[%s705 + $0xc] sm:$0xf]
    %v710 = vld [vmem:[%s705 + $0x10] sm:$0xf]
    %v711 = vld [vmem:[%s705 + $0x14] sm:$0xf]
    %v712 = vld [vmem:[%s705 + $0x18] sm:$0xf]
    %v713 = vld [vmem:[%s705 + $0x1c] sm:$0xf]
    %v714 = vld [vmem:[%s705 + $0x20] sm:$0xf]
    %v715 = vld [vmem:[%s705 + $0x24] sm:$0xf]
    %v716 = vld [vmem:[%s705 + $0x28] sm:$0xf]
    %v717 = vld [vmem:[%s705 + $0x2c] sm:$0xf]
    %v718 = vld [vmem:[%s705 + $0x30] sm:$0xf]
    %v719 = vld [vmem:[%s705 + $0x34] sm:$0xf]
    %v720 = vld [vmem:[%s705 + $0x38] sm:$0xf]
    %v721 = vld [vmem:[%s705 + $0x3c] sm:$0xf]
    %v722 = vlaneseq
    %v723 = vshrl.u32 %v722, 7
    %v724 = vsub.s32 0, %v723
    %v725 = vrot.slane %v703, %v724
    %v742 = vunpack.c.l.b16 %v706
    %v743 = vunpack.c.l.b16 %v707
    %v744 = vunpack.c.l.b16 %v708
    %v745 = vunpack.c.l.b16 %v709
    %v746 = vunpack.c.l.b16 %v710
    %v747 = vunpack.c.l.b16 %v711
    %v748 = vunpack.c.l.b16 %v712
    %v749 = vunpack.c.l.b16 %v713
    %v750 = vunpack.c.l.b16 %v714
    %v751 = vunpack.c.l.b16 %v715
    %v752 = vunpack.c.l.b16 %v716
    %v753 = vunpack.c.l.b16 %v717
    %v754 = vunpack.c.l.b16 %v718
    %v755 = vunpack.c.l.b16 %v719
    %v756 = vunpack.c.l.b16 %v720
    %v757 = vunpack.c.l.b16 %v721
    %v758 = vpack.c.b16 %v743, %v742
    %v759 = vpack.c.b16 %v745, %v744
    %v760 = vpack.c.b16 %v747, %v746
    %v761 = vpack.c.b16 %v749, %v748
    %v762 = vpack.c.b16 %v751, %v750
    %v763 = vpack.c.b16 %v753, %v752
    %v764 = vpack.c.b16 %v755, %v754
    %v765 = vpack.c.b16 %v757, %v756
    %774 = vmatprep.subr.bf16.mxu0 0
    %775 = vmatpush1.bf16.msra.mxu0 %v765
    %776 = vmatprep.subr.bf16.mxu0 0
    %777 = vmatpush1.bf16.msra.mxu0 %v764
    %778 = vmatprep.subr.bf16.mxu0 0
    %779 = vmatpush1.bf16.msra.mxu0 %v763
    %780 = vmatprep.subr.bf16.mxu0 0
    %781 = vmatpush1.bf16.msra.mxu0 %v762
    %782 = vmatprep.subr.bf16.mxu0 0
    %783 = vmatpush1.bf16.msra.mxu0 %v761
    %784 = vmatprep.subr.bf16.mxu0 0
    %785 = vmatpush1.bf16.msra.mxu0 %v760
    %786 = vmatprep.subr.bf16.mxu0 0
    %787 = vmatpush1.bf16.msra.mxu0 %v759
    %788 = vmatprep.subr.bf16.mxu0 0
    %789 = vmatpush1.bf16.msra.mxu0 %v758
    %790 = vmatprep.subr.bf16.mxu0 0
    %791 = vmatpush2.bf16.msra.mxu0 0
    %792 = vmatprep.subr.bf16.mxu0 0
    %793 = vmatpush2.bf16.msra.mxu0 0
    %794 = vmatprep.subr.bf16.mxu0 0
    %795 = vmatpush2.bf16.msra.mxu0 0
    %796 = vmatprep.subr.bf16.mxu0 0
    %797 = vmatpush2.bf16.msra.mxu0 0
    %798 = vmatprep.subr.bf16.mxu0 0
    %799 = vmatpush2.bf16.msra.mxu0 0
    %800 = vmatprep.subr.bf16.mxu0 0
    %801 = vmatpush2.bf16.msra.mxu0 0
    %802 = vmatprep.subr.bf16.mxu0 0
    %803 = vmatpush2.bf16.msra.mxu0 0
    %804 = vmatprep.subr.bf16.mxu0 0
    %805 = vmatpush2.bf16.msra.mxu0 0
    %806 = vmatprep.mubr.bf16.mxu0 0
    %807 = vmatmul.mubr.bf16.gmra.mxu0 %v704
    %v808 = vpop.f32.mrf.mxu0
    %v809 = vadd.f32 %v725, %v808
    %v810 = vpop.f32.mrf.mxu0
    %v811 = vpop.f32.mrf.mxu0
    %v812 = vpop.f32.mrf.mxu0
    %813 = vdwg.mxu0
    %v814 = vmax.f32 %v809, 0.0
    %815 = vadd.xlane.f32.xlu0 %v814
    %v816 = vpop.xlane.xlu0 %815
    %v817 = vmul.f32 %v816, %v251
    %v818 = vsub.f32 %v814, %v817
    %v819 = vmul.f32 %v818, %v818
    %820 = vadd.xlane.f32.xlu0 %v819
    %v821 = vpop.xlane.xlu0 %820
    %v822 = vmul.f32 %v821, %v251
    %v823 = vadd.f32 %v822, 1e-05
    %v824 = vrsqrt.pop %v823
    %v825 = vmul.f32 %v818, %v824
    %v826 = vlaneseq
    %v827 = vshrl.u32 %v826, 7
    %v828 = vsub.s32 1, %v827
    %v829 = vrot.slane %v703, %v828
    %v830 = vmul.f32 %v825, %v829
    %v831 = vlaneseq
    %v832 = vshrl.u32 %v831, 7
    %v833 = vsub.s32 2, %v832
    %v834 = vrot.slane %v703, %v833
    %v835 = vadd.f32 %v830, %v834
    %s836 = scalar_lea.vmem [#allocation11], 12
    %v837 = vld [vmem:[%s836] sm:$0x7]
    %v838 = vpack.c.bf16 %v835, %v835
    %s839 = scalar_lea.vmem [#allocation10], 192
    %v840 = vld [vmem:[%s839] sm:$0xf]
    %v841 = vld [vmem:[%s839 + $0x4] sm:$0xf]
    %v842 = vld [vmem:[%s839 + $0x8] sm:$0xf]
    %v843 = vld [vmem:[%s839 + $0xc] sm:$0xf]
    %v844 = vld [vmem:[%s839 + $0x10] sm:$0xf]
    %v845 = vld [vmem:[%s839 + $0x14] sm:$0xf]
    %v846 = vld [vmem:[%s839 + $0x18] sm:$0xf]
    %v847 = vld [vmem:[%s839 + $0x1c] sm:$0xf]
    %v848 = vld [vmem:[%s839 + $0x20] sm:$0xf]
    %v849 = vld [vmem:[%s839 + $0x24] sm:$0xf]
    %v850 = vld [vmem:[%s839 + $0x28] sm:$0xf]
    %v851 = vld [vmem:[%s839 + $0x2c] sm:$0xf]
    %v852 = vld [vmem:[%s839 + $0x30] sm:$0xf]
    %v853 = vld [vmem:[%s839 + $0x34] sm:$0xf]
    %v854 = vld [vmem:[%s839 + $0x38] sm:$0xf]
    %v855 = vld [vmem:[%s839 + $0x3c] sm:$0xf]
    %v856 = vlaneseq
    %v857 = vshrl.u32 %v856, 7
    %v858 = vsub.s32 0, %v857
    %v859 = vrot.slane %v837, %v858
    %v876 = vunpack.c.l.b16 %v840
    %v877 = vunpack.c.l.b16 %v841
    %v878 = vunpack.c.l.b16 %v842
    %v879 = vunpack.c.l.b16 %v843
    %v880 = vunpack.c.l.b16 %v844
    %v881 = vunpack.c.l.b16 %v845
    %v882 = vunpack.c.l.b16 %v846
    %v883 = vunpack.c.l.b16 %v847
    %v884 = vunpack.c.l.b16 %v848
    %v885 = vunpack.c.l.b16 %v849
    %v886 = vunpack.c.l.b16 %v850
    %v887 = vunpack.c.l.b16 %v851
    %v888 = vunpack.c.l.b16 %v852
    %v889 = vunpack.c.l.b16 %v853
    %v890 = vunpack.c.l.b16 %v854
    %v891 = vunpack.c.l.b16 %v855
    %v892 = vpack.c.b16 %v877, %v876
    %v893 = vpack.c.b16 %v879, %v878
    %v894 = vpack.c.b16 %v881, %v880
    %v895 = vpack.c.b16 %v883, %v882
    %v896 = vpack.c.b16 %v885, %v884
    %v897 = vpack.c.b16 %v887, %v886
    %v898 = vpack.c.b16 %v889, %v888
    %v899 = vpack.c.b16 %v891, %v890
    %908 = vmatprep.subr.bf16.mxu0 0
    %909 = vmatpush1.bf16.msra.mxu0 %v899
    %910 = vmatprep.subr.bf16.mxu0 0
    %911 = vmatpush1.bf16.msra.mxu0 %v898
    %912 = vmatprep.subr.bf16.mxu0 0
    %913 = vmatpush1.bf16.msra.mxu0 %v897
    %914 = vmatprep.subr.bf16.mxu0 0
    %915 = vmatpush1.bf16.msra.mxu0 %v896
    %916 = vmatprep.subr.bf16.mxu0 0
    %917 = vmatpush1.bf16.msra.mxu0 %v895
    %918 = vmatprep.subr.bf16.mxu0 0
    %919 = vmatpush1.bf16.msra.mxu0 %v894
    %920 = vmatprep.subr.bf16.mxu0 0
    %921 = vmatpush1.bf16.msra.mxu0 %v893
    %922 = vmatprep.subr.bf16.mxu0 0
    %923 = vmatpush1.bf16.msra.mxu0 %v892
    %924 = vmatprep.subr.bf16.mxu0 0
    %925 = vmatpush2.bf16.msra.mxu0 0
    %926 = vmatprep.subr.bf16.mxu0 0
    %927 = vmatpush2.bf16.msra.mxu0 0
    %928 = vmatprep.subr.bf16.mxu0 0
    %929 = vmatpush2.bf16.msra.mxu0 0
    %930 = vmatprep.subr.bf16.mxu0 0
    %931 = vmatpush2.bf16.msra.mxu0 0
    %932 = vmatprep.subr.bf16.mxu0 0
    %933 = vmatpush2.bf16.msra.mxu0 0
    %934 = vmatprep.subr.bf16.mxu0 0
    %935 = vmatpush2.bf16.msra.mxu0 0
    %936 = vmatprep.subr.bf16.mxu0 0
    %937 = vmatpush2.bf16.msra.mxu0 0
    %938 = vmatprep.subr.bf16.mxu0 0
    %939 = vmatpush2.bf16.msra.mxu0 0
    %940 = vmatprep.mubr.bf16.mxu0 0
    %941 = vmatmul.mubr.bf16.gmra.mxu0 %v838
    %v942 = vpop.f32.mrf.mxu0
    %v943 = vadd.f32 %v859, %v942
    %v944 = vpop.f32.mrf.mxu0
    %v945 = vpop.f32.mrf.mxu0
    %v946 = vpop.f32.mrf.mxu0
    %947 = vdwg.mxu0
    %v948 = vmax.f32 %v943, 0.0
    %949 = vadd.xlane.f32.xlu0 %v948
    %v950 = vpop.xlane.xlu0 %949
    %v951 = vmul.f32 %v950, %v251
    %v952 = vsub.f32 %v948, %v951
    %v953 = vmul.f32 %v952, %v952
    %954 = vadd.xlane.f32.xlu0 %v953
    %v955 = vpop.xlane.xlu0 %954
    %v956 = vmul.f32 %v955, %v251
    %v957 = vadd.f32 %v956, 1e-05
    %v958 = vrsqrt.pop %v957
    %v959 = vmul.f32 %v952, %v958
    %v960 = vlaneseq
    %v961 = vshrl.u32 %v960, 7
    %v962 = vsub.s32 1, %v961
    %v963 = vrot.slane %v837, %v962
    %v964 = vmul.f32 %v959, %v963
    %v965 = vlaneseq
    %v966 = vshrl.u32 %v965, 7
    %v967 = vsub.s32 2, %v966
    %v968 = vrot.slane %v837, %v967
    %v969 = vadd.f32 %v964, %v968
    %v970 = vpack.c.bf16 %v969, %v969
    %s971 = scalar_lea.vmem [#allocation13], 64
    %v972 = vld [vmem:[%s971] sm:$0xf]
    %v973 = vld [vmem:[%s971 + $0x4] sm:$0xf]
    %v974 = vld [vmem:[%s971 + $0x8] sm:$0xf]
    %v975 = vld [vmem:[%s971 + $0xc] sm:$0xf]
    %v976 = vld [vmem:[%s971 + $0x10] sm:$0xf]
    %v977 = vld [vmem:[%s971 + $0x14] sm:$0xf]
    %v978 = vld [vmem:[%s971 + $0x18] sm:$0xf]
    %v979 = vld [vmem:[%s971 + $0x1c] sm:$0xf]
    %v980 = vld [vmem:[%s971 + $0x20] sm:$0xf]
    %v981 = vld [vmem:[%s971 + $0x24] sm:$0xf]
    %v982 = vld [vmem:[%s971 + $0x28] sm:$0xf]
    %v983 = vld [vmem:[%s971 + $0x2c] sm:$0xf]
    %v984 = vld [vmem:[%s971 + $0x30] sm:$0xf]
    %v985 = vld [vmem:[%s971 + $0x34] sm:$0xf]
    %v986 = vld [vmem:[%s971 + $0x38] sm:$0xf]
    %v987 = vld [vmem:[%s971 + $0x3c] sm:$0xf]
    %v1004 = vunpack.c.l.b16 %v972
    %v1005 = vunpack.c.l.b16 %v973
    %v1006 = vunpack.c.l.b16 %v974
    %v1007 = vunpack.c.l.b16 %v975
    %v1008 = vunpack.c.l.b16 %v976
    %v1009 = vunpack.c.l.b16 %v977
    %v1010 = vunpack.c.l.b16 %v978
    %v1011 = vunpack.c.l.b16 %v979
    %v1012 = vunpack.c.l.b16 %v980
    %v1013 = vunpack.c.l.b16 %v981
    %v1014 = vunpack.c.l.b16 %v982
    %v1015 = vunpack.c.l.b16 %v983
    %v1016 = vunpack.c.l.b16 %v984
    %v1017 = vunpack.c.l.b16 %v985
    %v1018 = vunpack.c.l.b16 %v986
    %v1019 = vunpack.c.l.b16 %v987
    %v1020 = vpack.c.b16 %v1005, %v1004
    %v1021 = vpack.c.b16 %v1007, %v1006
    %v1022 = vpack.c.b16 %v1009, %v1008
    %v1023 = vpack.c.b16 %v1011, %v1010
    %v1024 = vpack.c.b16 %v1013, %v1012
    %v1025 = vpack.c.b16 %v1015, %v1014
    %v1026 = vpack.c.b16 %v1017, %v1016
    %v1027 = vpack.c.b16 %v1019, %v1018
    %1036 = vmatprep.subr.bf16.mxu0 0
    %1037 = vmatpush1.bf16.msra.mxu0 %v1027
    %1038 = vmatprep.subr.bf16.mxu0 0
    %1039 = vmatpush1.bf16.msra.mxu0 %v1026
    %1040 = vmatprep.subr.bf16.mxu0 0
    %1041 = vmatpush1.bf16.msra.mxu0 %v1025
    %1042 = vmatprep.subr.bf16.mxu0 0
    %1043 = vmatpush1.bf16.msra.mxu0 %v1024
    %1044 = vmatprep.subr.bf16.mxu0 0
    %1045 = vmatpush1.bf16.msra.mxu0 %v1023
    %1046 = vmatprep.subr.bf16.mxu0 0
    %1047 = vmatpush1.bf16.msra.mxu0 %v1022
    %1048 = vmatprep.subr.bf16.mxu0 0
    %1049 = vmatpush1.bf16.msra.mxu0 %v1021
    %1050 = vmatprep.subr.bf16.mxu0 0
    %1051 = vmatpush1.bf16.msra.mxu0 %v1020
    %1052 = vmatprep.subr.bf16.mxu0 0
    %1053 = vmatpush2.bf16.msra.mxu0 0
    %1054 = vmatprep.subr.bf16.mxu0 0
    %1055 = vmatpush2.bf16.msra.mxu0 0
    %1056 = vmatprep.subr.bf16.mxu0 0
    %1057 = vmatpush2.bf16.msra.mxu0 0
    %1058 = vmatprep.subr.bf16.mxu0 0
    %1059 = vmatpush2.bf16.msra.mxu0 0
    %1060 = vmatprep.subr.bf16.mxu0 0
    %1061 = vmatpush2.bf16.msra.mxu0 0
    %1062 = vmatprep.subr.bf16.mxu0 0
    %1063 = vmatpush2.bf16.msra.mxu0 0
    %1064 = vmatprep.subr.bf16.mxu0 0
    %1065 = vmatpush2.bf16.msra.mxu0 0
    %1066 = vmatprep.subr.bf16.mxu0 0
    %1067 = vmatpush2.bf16.msra.mxu0 0
    %1068 = vmatprep.mubr.bf16.mxu0 0
    %1069 = vmatmul.mubr.bf16.gmra.mxu0 %v970
    %v1070 = vpop.f32.mrf.mxu0
    %v1071 = vadd.f32 0.0, %v1070
    %v1072 = vpop.f32.mrf.mxu0
    %v1073 = vpop.f32.mrf.mxu0
    %v1074 = vpop.f32.mrf.mxu0
    %1075 = vdwg.mxu0
    %v1092 = vunpack.c.l.b16 %v538
    %v1093 = vunpack.c.l.b16 %v539
    %v1094 = vunpack.c.l.b16 %v540
    %v1095 = vunpack.c.l.b16 %v541
    %v1096 = vunpack.c.l.b16 %v542
    %v1097 = vunpack.c.l.b16 %v543
    %v1098 = vunpack.c.l.b16 %v544
    %v1099 = vunpack.c.l.b16 %v545
    %v1100 = vunpack.c.l.b16 %v546
    %v1101 = vunpack.c.l.b16 %v547
    %v1102 = vunpack.c.l.b16 %v548
    %v1103 = vunpack.c.l.b16 %v549
    %v1104 = vunpack.c.l.b16 %v550
    %v1105 = vunpack.c.l.b16 %v551
    %v1106 = vunpack.c.l.b16 %v552
    %v1107 = vunpack.c.l.b16 %v553
    %v1108 = vpack.c.b16 %v1093, %v1092
    %v1109 = vpack.c.b16 %v1095, %v1094
    %v1110 = vpack.c.b16 %v1097, %v1096
    %v1111 = vpack.c.b16 %v1099, %v1098
    %v1112 = vpack.c.b16 %v1101, %v1100
    %v1113 = vpack.c.b16 %v1103, %v1102
    %v1114 = vpack.c.b16 %v1105, %v1104
    %v1115 = vpack.c.b16 %v1107, %v1106
    %1124 = vmatprep.subr.bf16.mxu0 0
    %1125 = vmatpush1.bf16.msra.mxu0 %v1115
    %1126 = vmatprep.subr.bf16.mxu0 0
    %1127 = vmatpush1.bf16.msra.mxu0 %v1114
    %1128 = vmatprep.subr.bf16.mxu0 0
    %1129 = vmatpush1.bf16.msra.mxu0 %v1113
    %1130 = vmatprep.subr.bf16.mxu0 0
    %1131 = vmatpush1.bf16.msra.mxu0 %v1112
    %1132 = vmatprep.subr.bf16.mxu0 0
    %1133 = vmatpush1.bf16.msra.mxu0 %v1111
    %1134 = vmatprep.subr.bf16.mxu0 0
    %1135 = vmatpush1.bf16.msra.mxu0 %v1110
    %1136 = vmatprep.subr.bf16.mxu0 0
    %1137 = vmatpush1.bf16.msra.mxu0 %v1109
    %1138 = vmatprep.subr.bf16.mxu0 0
    %1139 = vmatpush1.bf16.msra.mxu0 %v1108
    %1140 = vmatprep.subr.bf16.mxu0 0
    %1141 = vmatpush2.bf16.msra.mxu0 0
    %1142 = vmatprep.subr.bf16.mxu0 0
    %1143 = vmatpush2.bf16.msra.mxu0 0
    %1144 = vmatprep.subr.bf16.mxu0 0
    %1145 = vmatpush2.bf16.msra.mxu0 0
    %1146 = vmatprep.subr.bf16.mxu0 0
    %1147 = vmatpush2.bf16.msra.mxu0 0
    %1148 = vmatprep.subr.bf16.mxu0 0
    %1149 = vmatpush2.bf16.msra.mxu0 0
    %1150 = vmatprep.subr.bf16.mxu0 0
    %1151 = vmatpush2.bf16.msra.mxu0 0
    %1152 = vmatprep.subr.bf16.mxu0 0
    %1153 = vmatpush2.bf16.msra.mxu0 0
    %1154 = vmatprep.subr.bf16.mxu0 0
    %1155 = vmatpush2.bf16.msra.mxu0 0
    %1156 = vmatprep.mubr.bf16.mxu0 0
    %1157 = vmatmul.mubr.bf16.gmra.mxu0 %v537
    %v1158 = vpop.f32.mrf.mxu0
    %v1159 = vadd.f32 %v1071, %v1158
    %v1160 = vpop.f32.mrf.mxu0
    %v1161 = vpop.f32.mrf.mxu0
    %v1162 = vpop.f32.mrf.mxu0
    %1163 = vdwg.mxu0
    %s1164 = scalar_lea.vmem [#allocation5], 4
    %v1165 = vld [vmem:[%s1164] sm:$0x3]
    %v1166 = vlaneseq
    %v1167 = vshrl.u32 %v1166, 7
    %v1168 = vsub.s32 0, %v1167
    %v1169 = vrot.slane %v1165, %v1168
    %v1170 = vsub.f32 %v124, %v1169
    %v1171 = vlaneseq
    %v1172 = vshrl.u32 %v1171, 7
    %v1173 = vsub.s32 1, %v1172
    %v1174 = vrot.slane %v1165, %v1173
    %v1175 = vmul.f32 %v1170, %v1174
    %v1176 = vmax.f32 %v1175, -10.0
    %v1177 = vmin.f32 %v1176, 10.0
    %s1178 = scalar_lea.vmem [#allocation8], 8
    %v1179 = vld [vmem:[%s1178] sm:$0x7]
    %v1180 = vpack.c.bf16 %v1177, %v1177
    %s1181 = scalar_lea.vmem [#allocation7], 128
    %v1182 = vld [vmem:[%s1181] sm:$0xf]
    %v1183 = vld [vmem:[%s1181 + $0x4] sm:$0xf]
    %v1184 = vld [vmem:[%s1181 + $0x8] sm:$0xf]
    %v1185 = vld [vmem:[%s1181 + $0xc] sm:$0xf]
    %v1186 = vld [vmem:[%s1181 + $0x10] sm:$0xf]
    %v1187 = vld [vmem:[%s1181 + $0x14] sm:$0xf]
    %v1188 = vld [vmem:[%s1181 + $0x18] sm:$0xf]
    %v1189 = vld [vmem:[%s1181 + $0x1c] sm:$0xf]
    %v1190 = vld [vmem:[%s1181 + $0x20] sm:$0xf]
    %v1191 = vld [vmem:[%s1181 + $0x24] sm:$0xf]
    %v1192 = vld [vmem:[%s1181 + $0x28] sm:$0xf]
    %v1193 = vld [vmem:[%s1181 + $0x2c] sm:$0xf]
    %v1194 = vld [vmem:[%s1181 + $0x30] sm:$0xf]
    %v1195 = vld [vmem:[%s1181 + $0x34] sm:$0xf]
    %v1196 = vld [vmem:[%s1181 + $0x38] sm:$0xf]
    %v1197 = vld [vmem:[%s1181 + $0x3c] sm:$0xf]
    %v1198 = vlaneseq
    %v1199 = vshrl.u32 %v1198, 7
    %v1200 = vsub.s32 0, %v1199
    %v1201 = vrot.slane %v1179, %v1200
    %v1218 = vunpack.c.l.b16 %v1182
    %v1219 = vunpack.c.l.b16 %v1183
    %v1220 = vunpack.c.l.b16 %v1184
    %v1221 = vunpack.c.l.b16 %v1185
    %v1222 = vunpack.c.l.b16 %v1186
    %v1223 = vunpack.c.l.b16 %v1187
    %v1224 = vunpack.c.l.b16 %v1188
    %v1225 = vunpack.c.l.b16 %v1189
    %v1226 = vunpack.c.l.b16 %v1190
    %v1227 = vunpack.c.l.b16 %v1191
    %v1228 = vunpack.c.l.b16 %v1192
    %v1229 = vunpack.c.l.b16 %v1193
    %v1230 = vunpack.c.l.b16 %v1194
    %v1231 = vunpack.c.l.b16 %v1195
    %v1232 = vunpack.c.l.b16 %v1196
    %v1233 = vunpack.c.l.b16 %v1197
    %v1234 = vpack.c.b16 %v1219, %v1218
    %v1235 = vpack.c.b16 %v1221, %v1220
    %v1236 = vpack.c.b16 %v1223, %v1222
    %v1237 = vpack.c.b16 %v1225, %v1224
    %v1238 = vpack.c.b16 %v1227, %v1226
    %v1239 = vpack.c.b16 %v1229, %v1228
    %v1240 = vpack.c.b16 %v1231, %v1230
    %v1241 = vpack.c.b16 %v1233, %v1232
    %1250 = vmatprep.subr.bf16.mxu0 0
    %1251 = vmatpush1.bf16.msra.mxu0 %v1241
    %1252 = vmatprep.subr.bf16.mxu0 0
    %1253 = vmatpush1.bf16.msra.mxu0 %v1240
    %1254 = vmatprep.subr.bf16.mxu0 0
    %1255 = vmatpush1.bf16.msra.mxu0 %v1239
    %1256 = vmatprep.subr.bf16.mxu0 0
    %1257 = vmatpush1.bf16.msra.mxu0 %v1238
    %1258 = vmatprep.subr.bf16.mxu0 0
    %1259 = vmatpush1.bf16.msra.mxu0 %v1237
    %1260 = vmatprep.subr.bf16.mxu0 0
    %1261 = vmatpush1.bf16.msra.mxu0 %v1236
    %1262 = vmatprep.subr.bf16.mxu0 0
    %1263 = vmatpush1.bf16.msra.mxu0 %v1235
    %1264 = vmatprep.subr.bf16.mxu0 0
    %1265 = vmatpush1.bf16.msra.mxu0 %v1234
    %1266 = vmatprep.subr.bf16.mxu0 0
    %1267 = vmatpush2.bf16.msra.mxu0 0
    %1268 = vmatprep.subr.bf16.mxu0 0
    %1269 = vmatpush2.bf16.msra.mxu0 0
    %1270 = vmatprep.subr.bf16.mxu0 0
    %1271 = vmatpush2.bf16.msra.mxu0 0
    %1272 = vmatprep.subr.bf16.mxu0 0
    %1273 = vmatpush2.bf16.msra.mxu0 0
    %1274 = vmatprep.subr.bf16.mxu0 0
    %1275 = vmatpush2.bf16.msra.mxu0 0
    %1276 = vmatprep.subr.bf16.mxu0 0
    %1277 = vmatpush2.bf16.msra.mxu0 0
    %1278 = vmatprep.subr.bf16.mxu0 0
    %1279 = vmatpush2.bf16.msra.mxu0 0
    %1280 = vmatprep.subr.bf16.mxu0 0
    %1281 = vmatpush2.bf16.msra.mxu0 0
    %1282 = vmatprep.mubr.bf16.mxu0 0
    %1283 = vmatmul.mubr.bf16.gmra.mxu0 %v1180
    %v1284 = vpop.f32.mrf.mxu0
    %v1285 = vadd.f32 %v1201, %v1284
    %v1286 = vpop.f32.mrf.mxu0
    %v1287 = vpop.f32.mrf.mxu0
    %v1288 = vpop.f32.mrf.mxu0
    %1289 = vdwg.mxu0
    %v1290 = vmax.f32 %v1285, 0.0
    %1291 = vadd.xlane.f32.xlu0 %v1290
    %v1292 = vpop.xlane.xlu0 %1291
    %v1293 = vmul.f32 %v1292, %v251
    %v1294 = vsub.f32 %v1290, %v1293
    %v1295 = vmul.f32 %v1294, %v1294
    %1296 = vadd.xlane.f32.xlu0 %v1295
    %v1297 = vpop.xlane.xlu0 %1296
    %v1298 = vmul.f32 %v1297, %v251
    %v1299 = vadd.f32 %v1298, 1e-05
    %v1300 = vrsqrt.pop %v1299
    %v1301 = vmul.f32 %v1294, %v1300
    %v1302 = vlaneseq
    %v1303 = vshrl.u32 %v1302, 7
    %v1304 = vsub.s32 1, %v1303
    %v1305 = vrot.slane %v1179, %v1304
    %v1306 = vmul.f32 %v1301, %v1305
    %v1307 = vlaneseq
    %v1308 = vshrl.u32 %v1307, 7
    %v1309 = vsub.s32 2, %v1308
    %v1310 = vrot.slane %v1179, %v1309
    %v1311 = vadd.f32 %v1306, %v1310
    %s1312 = scalar_lea.vmem [#allocation11], 16
    %v1313 = vld [vmem:[%s1312] sm:$0x7]
    %v1314 = vpack.c.bf16 %v1311, %v1311
    %s1315 = scalar_lea.vmem [#allocation10], 256
    %v1316 = vld [vmem:[%s1315] sm:$0xf]
    %v1317 = vld [vmem:[%s1315 + $0x4] sm:$0xf]
    %v1318 = vld [vmem:[%s1315 + $0x8] sm:$0xf]
    %v1319 = vld [vmem:[%s1315 + $0xc] sm:$0xf]
    %v1320 = vld [vmem:[%s1315 + $0x10] sm:$0xf]
    %v1321 = vld [vmem:[%s1315 + $0x14] sm:$0xf]
    %v1322 = vld [vmem:[%s1315 + $0x18] sm:$0xf]
    %v1323 = vld [vmem:[%s1315 + $0x1c] sm:$0xf]
    %v1324 = vld [vmem:[%s1315 + $0x20] sm:$0xf]
    %v1325 = vld [vmem:[%s1315 + $0x24] sm:$0xf]
    %v1326 = vld [vmem:[%s1315 + $0x28] sm:$0xf]
    %v1327 = vld [vmem:[%s1315 + $0x2c] sm:$0xf]
    %v1328 = vld [vmem:[%s1315 + $0x30] sm:$0xf]
    %v1329 = vld [vmem:[%s1315 + $0x34] sm:$0xf]
    %v1330 = vld [vmem:[%s1315 + $0x38] sm:$0xf]
    %v1331 = vld [vmem:[%s1315 + $0x3c] sm:$0xf]
    %v1332 = vlaneseq
    %v1333 = vshrl.u32 %v1332, 7
    %v1334 = vsub.s32 0, %v1333
    %v1335 = vrot.slane %v1313, %v1334
    %v1352 = vunpack.c.l.b16 %v1316
    %v1353 = vunpack.c.l.b16 %v1317
    %v1354 = vunpack.c.l.b16 %v1318
    %v1355 = vunpack.c.l.b16 %v1319
    %v1356 = vunpack.c.l.b16 %v1320
    %v1357 = vunpack.c.l.b16 %v1321
    %v1358 = vunpack.c.l.b16 %v1322
    %v1359 = vunpack.c.l.b16 %v1323
    %v1360 = vunpack.c.l.b16 %v1324
    %v1361 = vunpack.c.l.b16 %v1325
    %v1362 = vunpack.c.l.b16 %v1326
    %v1363 = vunpack.c.l.b16 %v1327
    %v1364 = vunpack.c.l.b16 %v1328
    %v1365 = vunpack.c.l.b16 %v1329
    %v1366 = vunpack.c.l.b16 %v1330
    %v1367 = vunpack.c.l.b16 %v1331
    %v1368 = vpack.c.b16 %v1353, %v1352
    %v1369 = vpack.c.b16 %v1355, %v1354
    %v1370 = vpack.c.b16 %v1357, %v1356
    %v1371 = vpack.c.b16 %v1359, %v1358
    %v1372 = vpack.c.b16 %v1361, %v1360
    %v1373 = vpack.c.b16 %v1363, %v1362
    %v1374 = vpack.c.b16 %v1365, %v1364
    %v1375 = vpack.c.b16 %v1367, %v1366
    %1384 = vmatprep.subr.bf16.mxu0 0
    %1385 = vmatpush1.bf16.msra.mxu0 %v1375
    %1386 = vmatprep.subr.bf16.mxu0 0
    %1387 = vmatpush1.bf16.msra.mxu0 %v1374
    %1388 = vmatprep.subr.bf16.mxu0 0
    %1389 = vmatpush1.bf16.msra.mxu0 %v1373
    %1390 = vmatprep.subr.bf16.mxu0 0
    %1391 = vmatpush1.bf16.msra.mxu0 %v1372
    %1392 = vmatprep.subr.bf16.mxu0 0
    %1393 = vmatpush1.bf16.msra.mxu0 %v1371
    %1394 = vmatprep.subr.bf16.mxu0 0
    %1395 = vmatpush1.bf16.msra.mxu0 %v1370
    %1396 = vmatprep.subr.bf16.mxu0 0
    %1397 = vmatpush1.bf16.msra.mxu0 %v1369
    %1398 = vmatprep.subr.bf16.mxu0 0
    %1399 = vmatpush1.bf16.msra.mxu0 %v1368
    %1400 = vmatprep.subr.bf16.mxu0 0
    %1401 = vmatpush2.bf16.msra.mxu0 0
    %1402 = vmatprep.subr.bf16.mxu0 0
    %1403 = vmatpush2.bf16.msra.mxu0 0
    %1404 = vmatprep.subr.bf16.mxu0 0
    %1405 = vmatpush2.bf16.msra.mxu0 0
    %1406 = vmatprep.subr.bf16.mxu0 0
    %1407 = vmatpush2.bf16.msra.mxu0 0
    %1408 = vmatprep.subr.bf16.mxu0 0
    %1409 = vmatpush2.bf16.msra.mxu0 0
    %1410 = vmatprep.subr.bf16.mxu0 0
    %1411 = vmatpush2.bf16.msra.mxu0 0
    %1412 = vmatprep.subr.bf16.mxu0 0
    %1413 = vmatpush2.bf16.msra.mxu0 0
    %1414 = vmatprep.subr.bf16.mxu0 0
    %1415 = vmatpush2.bf16.msra.mxu0 0
    %1416 = vmatprep.mubr.bf16.mxu0 0
    %1417 = vmatmul.mubr.bf16.gmra.mxu0 %v1314
    %v1418 = vpop.f32.mrf.mxu0
    %v1419 = vadd.f32 %v1335, %v1418
    %v1420 = vpop.f32.mrf.mxu0
    %v1421 = vpop.f32.mrf.mxu0
    %v1422 = vpop.f32.mrf.mxu0
    %1423 = vdwg.mxu0
    %v1424 = vmax.f32 %v1419, 0.0
    %1425 = vadd.xlane.f32.xlu0 %v1424
    %v1426 = vpop.xlane.xlu0 %1425
    %v1427 = vmul.f32 %v1426, %v251
    %v1428 = vsub.f32 %v1424, %v1427
    %v1429 = vmul.f32 %v1428, %v1428
    %1430 = vadd.xlane.f32.xlu0 %v1429
    %v1431 = vpop.xlane.xlu0 %1430
    %v1432 = vmul.f32 %v1431, %v251
    %v1433 = vadd.f32 %v1432, 1e-05
    %v1434 = vrsqrt.pop %v1433
    %v1435 = vmul.f32 %v1428, %v1434
    %v1436 = vlaneseq
    %v1437 = vshrl.u32 %v1436, 7
    %v1438 = vsub.s32 1, %v1437
    %v1439 = vrot.slane %v1313, %v1438
    %v1440 = vmul.f32 %v1435, %v1439
    %v1441 = vlaneseq
    %v1442 = vshrl.u32 %v1441, 7
    %v1443 = vsub.s32 2, %v1442
    %v1444 = vrot.slane %v1313, %v1443
    %v1445 = vadd.f32 %v1440, %v1444
    %s1446 = scalar_lea.vmem [#allocation11], 20
    %v1447 = vld [vmem:[%s1446] sm:$0x7]
    %v1448 = vpack.c.bf16 %v1445, %v1445
    %s1449 = scalar_lea.vmem [#allocation10], 320
    %v1450 = vld [vmem:[%s1449] sm:$0xf]
    %v1451 = vld [vmem:[%s1449 + $0x4] sm:$0xf]
    %v1452 = vld [vmem:[%s1449 + $0x8] sm:$0xf]
    %v1453 = vld [vmem:[%s1449 + $0xc] sm:$0xf]
    %v1454 = vld [vmem:[%s1449 + $0x10] sm:$0xf]
    %v1455 = vld [vmem:[%s1449 + $0x14] sm:$0xf]
    %v1456 = vld [vmem:[%s1449 + $0x18] sm:$0xf]
    %v1457 = vld [vmem:[%s1449 + $0x1c] sm:$0xf]
    %v1458 = vld [vmem:[%s1449 + $0x20] sm:$0xf]
    %v1459 = vld [vmem:[%s1449 + $0x24] sm:$0xf]
    %v1460 = vld [vmem:[%s1449 + $0x28] sm:$0xf]
    %v1461 = vld [vmem:[%s1449 + $0x2c] sm:$0xf]
    %v1462 = vld [vmem:[%s1449 + $0x30] sm:$0xf]
    %v1463 = vld [vmem:[%s1449 + $0x34] sm:$0xf]
    %v1464 = vld [vmem:[%s1449 + $0x38] sm:$0xf]
    %v1465 = vld [vmem:[%s1449 + $0x3c] sm:$0xf]
    %v1466 = vlaneseq
    %v1467 = vshrl.u32 %v1466, 7
    %v1468 = vsub.s32 0, %v1467
    %v1469 = vrot.slane %v1447, %v1468
    %v1486 = vunpack.c.l.b16 %v1450
    %v1487 = vunpack.c.l.b16 %v1451
    %v1488 = vunpack.c.l.b16 %v1452
    %v1489 = vunpack.c.l.b16 %v1453
    %v1490 = vunpack.c.l.b16 %v1454
    %v1491 = vunpack.c.l.b16 %v1455
    %v1492 = vunpack.c.l.b16 %v1456
    %v1493 = vunpack.c.l.b16 %v1457
    %v1494 = vunpack.c.l.b16 %v1458
    %v1495 = vunpack.c.l.b16 %v1459
    %v1496 = vunpack.c.l.b16 %v1460
    %v1497 = vunpack.c.l.b16 %v1461
    %v1498 = vunpack.c.l.b16 %v1462
    %v1499 = vunpack.c.l.b16 %v1463
    %v1500 = vunpack.c.l.b16 %v1464
    %v1501 = vunpack.c.l.b16 %v1465
    %v1502 = vpack.c.b16 %v1487, %v1486
    %v1503 = vpack.c.b16 %v1489, %v1488
    %v1504 = vpack.c.b16 %v1491, %v1490
    %v1505 = vpack.c.b16 %v1493, %v1492
    %v1506 = vpack.c.b16 %v1495, %v1494
    %v1507 = vpack.c.b16 %v1497, %v1496
    %v1508 = vpack.c.b16 %v1499, %v1498
    %v1509 = vpack.c.b16 %v1501, %v1500
    %1518 = vmatprep.subr.bf16.mxu0 0
    %1519 = vmatpush1.bf16.msra.mxu0 %v1509
    %1520 = vmatprep.subr.bf16.mxu0 0
    %1521 = vmatpush1.bf16.msra.mxu0 %v1508
    %1522 = vmatprep.subr.bf16.mxu0 0
    %1523 = vmatpush1.bf16.msra.mxu0 %v1507
    %1524 = vmatprep.subr.bf16.mxu0 0
    %1525 = vmatpush1.bf16.msra.mxu0 %v1506
    %1526 = vmatprep.subr.bf16.mxu0 0
    %1527 = vmatpush1.bf16.msra.mxu0 %v1505
    %1528 = vmatprep.subr.bf16.mxu0 0
    %1529 = vmatpush1.bf16.msra.mxu0 %v1504
    %1530 = vmatprep.subr.bf16.mxu0 0
    %1531 = vmatpush1.bf16.msra.mxu0 %v1503
    %1532 = vmatprep.subr.bf16.mxu0 0
    %1533 = vmatpush1.bf16.msra.mxu0 %v1502
    %1534 = vmatprep.subr.bf16.mxu0 0
    %1535 = vmatpush2.bf16.msra.mxu0 0
    %1536 = vmatprep.subr.bf16.mxu0 0
    %1537 = vmatpush2.bf16.msra.mxu0 0
    %1538 = vmatprep.subr.bf16.mxu0 0
    %1539 = vmatpush2.bf16.msra.mxu0 0
    %1540 = vmatprep.subr.bf16.mxu0 0
    %1541 = vmatpush2.bf16.msra.mxu0 0
    %1542 = vmatprep.subr.bf16.mxu0 0
    %1543 = vmatpush2.bf16.msra.mxu0 0
    %1544 = vmatprep.subr.bf16.mxu0 0
    %1545 = vmatpush2.bf16.msra.mxu0 0
    %1546 = vmatprep.subr.bf16.mxu0 0
    %1547 = vmatpush2.bf16.msra.mxu0 0
    %1548 = vmatprep.subr.bf16.mxu0 0
    %1549 = vmatpush2.bf16.msra.mxu0 0
    %1550 = vmatprep.mubr.bf16.mxu0 0
    %1551 = vmatmul.mubr.bf16.gmra.mxu0 %v1448
    %v1552 = vpop.f32.mrf.mxu0
    %v1553 = vadd.f32 %v1469, %v1552
    %v1554 = vpop.f32.mrf.mxu0
    %v1555 = vpop.f32.mrf.mxu0
    %v1556 = vpop.f32.mrf.mxu0
    %1557 = vdwg.mxu0
    %v1558 = vmax.f32 %v1553, 0.0
    %1559 = vadd.xlane.f32.xlu0 %v1558
    %v1560 = vpop.xlane.xlu0 %1559
    %v1561 = vmul.f32 %v1560, %v251
    %v1562 = vsub.f32 %v1558, %v1561
    %v1563 = vmul.f32 %v1562, %v1562
    %1564 = vadd.xlane.f32.xlu0 %v1563
    %v1565 = vpop.xlane.xlu0 %1564
    %v1566 = vmul.f32 %v1565, %v251
    %v1567 = vadd.f32 %v1566, 1e-05
    %v1568 = vrsqrt.pop %v1567
    %v1569 = vmul.f32 %v1562, %v1568
    %v1570 = vlaneseq
    %v1571 = vshrl.u32 %v1570, 7
    %v1572 = vsub.s32 1, %v1571
    %v1573 = vrot.slane %v1447, %v1572
    %v1574 = vmul.f32 %v1569, %v1573
    %v1575 = vlaneseq
    %v1576 = vshrl.u32 %v1575, 7
    %v1577 = vsub.s32 2, %v1576
    %v1578 = vrot.slane %v1447, %v1577
    %v1579 = vadd.f32 %v1574, %v1578
    %v1580 = vpack.c.bf16 %v1579, %v1579
    %s1581 = scalar_lea.vmem [#allocation13], 128
    %v1582 = vld [vmem:[%s1581] sm:$0xf]
    %v1583 = vld [vmem:[%s1581 + $0x4] sm:$0xf]
    %v1584 = vld [vmem:[%s1581 + $0x8] sm:$0xf]
    %v1585 = vld [vmem:[%s1581 + $0xc] sm:$0xf]
    %v1586 = vld [vmem:[%s1581 + $0x10] sm:$0xf]
    %v1587 = vld [vmem:[%s1581 + $0x14] sm:$0xf]
    %v1588 = vld [vmem:[%s1581 + $0x18] sm:$0xf]
    %v1589 = vld [vmem:[%s1581 + $0x1c] sm:$0xf]
    %v1590 = vld [vmem:[%s1581 + $0x20] sm:$0xf]
    %v1591 = vld [vmem:[%s1581 + $0x24] sm:$0xf]
    %v1592 = vld [vmem:[%s1581 + $0x28] sm:$0xf]
    %v1593 = vld [vmem:[%s1581 + $0x2c] sm:$0xf]
    %v1594 = vld [vmem:[%s1581 + $0x30] sm:$0xf]
    %v1595 = vld [vmem:[%s1581 + $0x34] sm:$0xf]
    %v1596 = vld [vmem:[%s1581 + $0x38] sm:$0xf]
    %v1597 = vld [vmem:[%s1581 + $0x3c] sm:$0xf]
    %v1614 = vunpack.c.l.b16 %v1582
    %v1615 = vunpack.c.l.b16 %v1583
    %v1616 = vunpack.c.l.b16 %v1584
    %v1617 = vunpack.c.l.b16 %v1585
    %v1618 = vunpack.c.l.b16 %v1586
    %v1619 = vunpack.c.l.b16 %v1587
    %v1620 = vunpack.c.l.b16 %v1588
    %v1621 = vunpack.c.l.b16 %v1589
    %v1622 = vunpack.c.l.b16 %v1590
    %v1623 = vunpack.c.l.b16 %v1591
    %v1624 = vunpack.c.l.b16 %v1592
    %v1625 = vunpack.c.l.b16 %v1593
    %v1626 = vunpack.c.l.b16 %v1594
    %v1627 = vunpack.c.l.b16 %v1595
    %v1628 = vunpack.c.l.b16 %v1596
    %v1629 = vunpack.c.l.b16 %v1597
    %v1630 = vpack.c.b16 %v1615, %v1614
    %v1631 = vpack.c.b16 %v1617, %v1616
    %v1632 = vpack.c.b16 %v1619, %v1618
    %v1633 = vpack.c.b16 %v1621, %v1620
    %v1634 = vpack.c.b16 %v1623, %v1622
    %v1635 = vpack.c.b16 %v1625, %v1624
    %v1636 = vpack.c.b16 %v1627, %v1626
    %v1637 = vpack.c.b16 %v1629, %v1628
    %1646 = vmatprep.subr.bf16.mxu0 0
    %1647 = vmatpush1.bf16.msra.mxu0 %v1637
    %1648 = vmatprep.subr.bf16.mxu0 0
    %1649 = vmatpush1.bf16.msra.mxu0 %v1636
    %1650 = vmatprep.subr.bf16.mxu0 0
    %1651 = vmatpush1.bf16.msra.mxu0 %v1635
    %1652 = vmatprep.subr.bf16.mxu0 0
    %1653 = vmatpush1.bf16.msra.mxu0 %v1634
    %1654 = vmatprep.subr.bf16.mxu0 0
    %1655 = vmatpush1.bf16.msra.mxu0 %v1633
    %1656 = vmatprep.subr.bf16.mxu0 0
    %1657 = vmatpush1.bf16.msra.mxu0 %v1632
    %1658 = vmatprep.subr.bf16.mxu0 0
    %1659 = vmatpush1.bf16.msra.mxu0 %v1631
    %1660 = vmatprep.subr.bf16.mxu0 0
    %1661 = vmatpush1.bf16.msra.mxu0 %v1630
    %1662 = vmatprep.subr.bf16.mxu0 0
    %1663 = vmatpush2.bf16.msra.mxu0 0
    %1664 = vmatprep.subr.bf16.mxu0 0
    %1665 = vmatpush2.bf16.msra.mxu0 0
    %1666 = vmatprep.subr.bf16.mxu0 0
    %1667 = vmatpush2.bf16.msra.mxu0 0
    %1668 = vmatprep.subr.bf16.mxu0 0
    %1669 = vmatpush2.bf16.msra.mxu0 0
    %1670 = vmatprep.subr.bf16.mxu0 0
    %1671 = vmatpush2.bf16.msra.mxu0 0
    %1672 = vmatprep.subr.bf16.mxu0 0
    %1673 = vmatpush2.bf16.msra.mxu0 0
    %1674 = vmatprep.subr.bf16.mxu0 0
    %1675 = vmatpush2.bf16.msra.mxu0 0
    %1676 = vmatprep.subr.bf16.mxu0 0
    %1677 = vmatpush2.bf16.msra.mxu0 0
    %1678 = vmatprep.mubr.bf16.mxu0 0
    %1679 = vmatmul.mubr.bf16.gmra.mxu0 %v1580
    %v1680 = vpop.f32.mrf.mxu0
    %v1681 = vadd.f32 0.0, %v1680
    %v1682 = vpop.f32.mrf.mxu0
    %v1683 = vpop.f32.mrf.mxu0
    %v1684 = vpop.f32.mrf.mxu0
    %1685 = vdwg.mxu0
    %v1686 = vadd.f32 %v1159, %v1681
    %v1687 = vld [vmem:[%s7] sm:$0x1]
    %v1689 = vlaneseq
    %v1690 = vshrl.u32 %v1689, 7
    %v1691 = vsub.s32 0, %v1690
    %v1692 = vrot.slane %v1687, %v1691
    %v1694 = vadd.f32 %v1686, %v1692
    %1695 = vst [vmem:[#allocation14] sm:$0xff] %v1694
    // Predicated region
    $region62: #{tpu_custom_call.1} parent=1 // pred_check
      _
    $region63: #{tpu_custom_call.1} parent=1 // pred_check_branch
      %1697 = sbr.rel (0) target = $region65
    $region64: #{tpu_custom_call.1} parent=1 // pred_region
      %s1699 = ssub.s32 128, 128
      %1700 = vsyncadd [#allocation4], %s1699
      %s1702 = sshll.u32 [#allocation14], 4
      %s1703 = int_to_ptr.vmem [resolvable:$true] %s1702
      %1705 = dma.vmem_to_hbm [thread:$0]  %s1703, 128, %s8, [#allocation4]
    $region65: #{tpu_custom_call.1} parent=1 // pred_fallthru
      _
    // Predicated region
    $region66: #{tpu_custom_call.1} parent=1 // pred_check
      _
    $region67: #{tpu_custom_call.1} parent=1 // pred_check_branch
      %1707 = sbr.rel (0) target = $region69
    $region68: #{tpu_custom_call.1} parent=1 // pred_region
      %1708 = dma.done [#allocation4], 128
    $region69: #{tpu_custom_call.1} parent=1 // pred_fallthru
      _
    %1709 = vsyncpa [#allocation3], 1
    %1710 = vsyncpa [#allocation6], 1
    %1711 = vsyncpa [#allocation9], 1
    %1712 = vsyncpa [#allocation12], 1
    %1713 = vsyncpa [#allocation4], 1

</llo_original>
